<compile_context>
chip_gen: v6e
topology: v6e:2x2x1
jax: 0.10.0
libtpu: 0.0.40
codegen_flags: <defaults>
</compile_context>

<pallas_src>
import functools
import math

import jax
import jax.numpy as jnp
from jax.experimental import pallas as pl
from jax.experimental.pallas import tpu as pltpu


# Set True on v6e/v7x for ~2x MXU throughput (bf16 inputs, f32 accumulate, ~1e-3 tolerance vs fp32).
_MXU_BF16 = False

_VMEM_LIMIT = 32 * 1024 * 1024          # fits v7x's 64 MiB physical VMEM with headroom
_SINGLE_K_BUDGET = 18 * 1024 * 1024     # max estimated footprint for the no-K-grid fast path
_TK_CANDIDATES = (512, 384, 256, 128)
_TN_CANDIDATES = (640, 512, 384, 256, 128)


def _round_up(x, m):
    return -(-x // m) * m


def _leaky(x):
    return jnp.where(x >= 0, x, x * 0.3)


# --------------------------------------------------------------------------------------
# Pallas kernels
# --------------------------------------------------------------------------------------

def _matmul_single_kernel(a_ref, b_ref, bias_ref, o_ref, *, pre_act):
    a = a_ref[...]
    if pre_act == "leaky":
        a = _leaky(a)
    o_ref[...] = (jnp.dot(a, b_ref[...], preferred_element_type=jnp.float32)
                  + bias_ref[...]).astype(o_ref.dtype)


def _matmul_kacc_kernel(a_ref, b_ref, bias_ref, o_ref, acc_ref, *, pre_act):
    @pl.when(pl.program_id(2) == 0)
    def _():
        acc_ref[...] = jnp.zeros_like(acc_ref)

    a = a_ref[...]
    if pre_act == "leaky":
        a = _leaky(a)
    acc_ref[...] += jnp.dot(a, b_ref[...], preferred_element_type=jnp.float32)

    @pl.when(pl.program_id(2) == pl.num_programs(2) - 1)
    def _():
        o_ref[...] = (acc_ref[...] + bias_ref[...]).astype(o_ref.dtype)


def _groupnorm_kernel(x_ref, g_ref, b_ref, o_ref, *, eps, groups, act):
    x = x_ref[0]                                   # (S, C) channels-last, S = H*W
    S, C = x.shape
    Cg = C // groups
    inv_cnt = 1.0 / float(S * Cg)
    # one-hot channel -> group matrix built on the VPU (no HBM broadcast of gamma/beta)
    c_idx = jax.lax.broadcasted_iota(jnp.int32, (groups, C), 1)
    g_idx = jax.lax.broadcasted_iota(jnp.int32, (groups, C), 0)
    gmat = jnp.logical_and(c_idx >= g_idx * Cg, c_idx < (g_idx + 1) * Cg).astype(jnp.float32)

    ch_sum = jnp.sum(x, axis=0, keepdims=True)                                    # (1, C)
    grp_mean = jax.lax.dot_general(ch_sum, gmat, (((1,), (1,)), ((), ())),
                                   preferred_element_type=jnp.float32) * inv_cnt  # (1, G)
    mean_c = jnp.dot(grp_mean, gmat, preferred_element_type=jnp.float32)          # (1, C)
    xc = x - mean_c
    ch_ss = jnp.sum(xc * xc, axis=0, keepdims=True)
    grp_var = jax.lax.dot_general(ch_ss, gmat, (((1,), (1,)), ((), ())),
                                  preferred_element_type=jnp.float32) * inv_cnt   # biased (torch)
    var_c = jnp.dot(grp_var, gmat, preferred_element_type=jnp.float32)            # (1, C)
    y = xc * jax.lax.rsqrt(var_c + eps) * g_ref[...] + b_ref[...]
    if act == "leaky":
        y = _leaky(y)
    o_ref[0] = y


def _layernorm_kernel(x_ref, g_ref, b_ref, o_ref, *, eps):
    x = x_ref[...]
    mean = jnp.mean(x, axis=-1, keepdims=True)
    var = jnp.mean(jnp.square(x - mean), axis=-1, keepdims=True)
    o_ref[...] = (x - mean) * jax.lax.rsqrt(var + eps) * g_ref[...] + b_ref[...]


def _attn_kernel(q_ref, k_ref, v_ref, o_ref, *, scale):
    # all heads of one sample at once: (H, S, D)
    q = q_ref[0]
    k = k_ref[0]
    v = v_ref[0]
    s = jnp.einsum("hqd,hkd->hqk", q, k, preferred_element_type=jnp.float32) * scale
    s = s - jnp.max(s, axis=-1, keepdims=True)
    p = jnp.exp(s)
    l = jnp.sum(p, axis=-1, keepdims=True)
    o = jnp.einsum("hqk,hkd->hqd", p, v, preferred_element_type=jnp.float32)
    # TODO(synk): full SxS scores per head; switch to online-softmax if spatial resolution grows.
    o_ref[0] = (o * pl.reciprocal(l, approx=True)).astype(o_ref.dtype)


# --------------------------------------------------------------------------------------
# jitted op wrappers around pallas_call
# --------------------------------------------------------------------------------------

def _plan_matmul(M, K, N):
    """Workload-matched tiling: returns (TM, Mp, TN, Np, TK, Kp, single_k)."""
    if M <= 256:
        TM, Mp = M, M                      # full-dim block: no row padding / output slicing
    else:
        TM, Mp = 256, _round_up(M, 256)
    if N <= 1536:
        TN, Np = N, N
    else:
        TN = next((c for c in _TN_CANDIDATES if N % c == 0), None)
        if TN is None:
            TN, Np = 128, _round_up(N, 128)
        else:
            Np = N
    # single-K fast path (no accumulator / K grid axis) whenever the whole K fits comfortably
    est = 8 * (TM * K + K * TN + TM * TN + TN)        # fp32, double-buffered
    if est <= _SINGLE_K_BUDGET:
        return TM, Mp, TN, Np, K, K, True
    TK = next((c for c in _TK_CANDIDATES if K % c == 0), None)
    if TK is None:                                    # ragged K (e.g. 960*9): pad to TK multiple
        TK = 512
    return TM, Mp, TN, Np, TK, _round_up(K, TK), False


@functools.partial(jax.jit, static_argnames=("pre_act",))
def matmul_op(a, wm, bias, pre_act=None):
    """y = act(a) @ wm + bias.  a: (M, K) fp32, wm: (K, N) matmul-ready, bias: (N,)."""
    M, K = a.shape
    _, N = wm.shape
    TM, Mp, TN, Np, TK, Kp, single = _plan_matmul(M, K, N)
    a_p = a if (Mp == M and Kp == K) else jnp.pad(a, ((0, Mp - M), (0, Kp - K)))
    w_p = wm if (Kp == K and Np == N) else jnp.pad(wm, ((0, Kp - K), (0, Np - N)))
    b_p = bias.reshape(1, N)
    if Np != N:
        b_p = jnp.pad(b_p, ((0, 0), (0, Np - N)))
    if _MXU_BF16:
        a_p = a_p.astype(jnp.bfloat16)
        w_p = w_p.astype(jnp.bfloat16)

    if single:
        out = pl.pallas_call(
            functools.partial(_matmul_single_kernel, pre_act=pre_act),
            out_shape=jax.ShapeDtypeStruct((Mp, Np), jnp.float32),
            grid=(Mp // TM, Np // TN),
            in_specs=[
                pl.BlockSpec((TM, Kp), lambda i, j: (i, 0)),
                pl.BlockSpec((Kp, TN), lambda i, j: (0, j)),
                pl.BlockSpec((1, TN), lambda i, j: (0, j)),
            ],
            out_specs=pl.BlockSpec((TM, TN), lambda i, j: (i, j)),
            compiler_params=pltpu.CompilerParams(
                dimension_semantics=("parallel", "parallel"),
                vmem_limit_bytes=_VMEM_LIMIT),
        )(a_p, w_p, b_p)
    else:
        out = pl.pallas_call(
            functools.partial(_matmul_kacc_kernel, pre_act=pre_act),
            out_shape=jax.ShapeDtypeStruct((Mp, Np), jnp.float32),
            grid=(Mp // TM, Np // TN, Kp // TK),
            in_specs=[
                pl.BlockSpec((TM, TK), lambda i, j, k: (i, k)),
                pl.BlockSpec((TK, TN), lambda i, j, k: (k, j)),
                pl.BlockSpec((1, TN), lambda i, j, k: (0, j)),
            ],
            out_specs=pl.BlockSpec((TM, TN), lambda i, j, k: (i, j)),
            scratch_shapes=[pltpu.VMEM((TM, TN), jnp.float32)],
            compiler_params=pltpu.CompilerParams(
                dimension_semantics=("parallel", "parallel", "arbitrary"),
                vmem_limit_bytes=_VMEM_LIMIT),
        )(a_p, w_p, b_p)
    if Mp != M or Np != N:
        out = out[:M, :N]
    return out


@functools.partial(jax.jit, static_argnames=("eps", "act", "groups"))
def groupnorm_op(x, gamma, beta, eps, act=None, groups=8):
    """GroupNorm(groups, C) over NHWC input, optional fused LeakyReLU(0.3) epilogue."""
    N, H, W, C = x.shape
    S = H * W
    xr = x.reshape(N, S, C)
    out = pl.pallas_call(
        functools.partial(_groupnorm_kernel, eps=eps, groups=groups, act=act),
        out_shape=jax.ShapeDtypeStruct((N, S, C), jnp.float32),
        grid=(N,),
        in_specs=[
            pl.BlockSpec((1, S, C), lambda n: (n, 0, 0)),
            pl.BlockSpec((1, C), lambda n: (0, 0)),
            pl.BlockSpec((1, C), lambda n: (0, 0)),
        ],
        out_specs=pl.BlockSpec((1, S, C), lambda n: (n, 0, 0)),
        compiler_params=pltpu.CompilerParams(dimension_semantics=("parallel",)),
    )(xr, gamma.reshape(1, C), beta.reshape(1, C))
    return out.reshape(N, H, W, C)


@functools.partial(jax.jit, static_argnames=("eps",))
def layernorm_op(x2, gamma, beta, eps=1e-5):
    """LayerNorm over last dim; x2: (tokens, C), tiled along tokens."""
    M, C = x2.shape
    bm = 256 if M % 256 == 0 else M
    return pl.pallas_call(
        functools.partial(_layernorm_kernel, eps=eps),
        out_shape=jax.ShapeDtypeStruct((M, C), jnp.float32),
        grid=(M // bm,),
        in_specs=[
            pl.BlockSpec((bm, C), lambda i: (i, 0)),
            pl.BlockSpec((1, C), lambda i: (0, 0)),
            pl.BlockSpec((1, C), lambda i: (0, 0)),
        ],
        out_specs=pl.BlockSpec((bm, C), lambda i: (i, 0)),
        compiler_params=pltpu.CompilerParams(dimension_semantics=("parallel",)),
    )(x2, gamma.reshape(1, C), beta.reshape(1, C))


@functools.partial(jax.jit, static_argnames=("scale",))
def attention_core_op(q, k, v, scale):
    """softmax(q k^T * scale) v for all heads of each sample; q,k,v: (N, H, S, D)."""
    N, Hh, S, D = q.shape
    return pl.pallas_call(
        functools.partial(_attn_kernel, scale=scale),
        out_shape=jax.ShapeDtypeStruct((N, Hh, S, D), jnp.float32),
        grid=(N,),
        in_specs=[pl.BlockSpec((1, Hh, S, D), lambda n: (n, 0, 0, 0))] * 3,
        out_specs=pl.BlockSpec((1, Hh, S, D), lambda n: (n, 0, 0, 0)),
        compiler_params=pltpu.CompilerParams(dimension_semantics=("parallel",)),
    )(q, k, v)


# --------------------------------------------------------------------------------------
# Conv glue (channels-last im2col) — patch extraction is data movement; matmul runs in Pallas.
# --------------------------------------------------------------------------------------

@functools.partial(jax.jit, static_argnames=("stride", "pre_act"))
def conv2d(p, x, stride=1, pre_act=None):
    """Conv2d on NHWC input. p["wm"] is (Cin, Cout) for 1x1 or (9*Cin, Cout) for 3x3/pad=1."""
    N, H, W, C = x.shape
    Cout = p["wm"].shape[1]
    if p["wm"].shape[0] == C:                               # 1x1 conv == per-token linear
        y = matmul_op(x.reshape(N * H * W, C), p["wm"], p["b"], pre_act=pre_act)
        return y.reshape(N, H, W, Cout)
    # 3x3, padding=1: channels-last im2col (tap-major, channel-minor order) — no transpose.
    # Fusing LeakyReLU as a matmul prologue is exact because leaky(0) == 0 on the padded border.
    Ho = (H - 1) // stride + 1
    Wo = (W - 1) // stride + 1
    xp = jnp.pad(x, ((0, 0), (1, 1), (1, 1), (0, 0)))
    cols = [xp[:, dy:dy + (Ho - 1) * stride + 1:stride,
                  dx:dx + (Wo - 1) * stride + 1:stride, :]
            for dy in range(3) for dx in range(3)]
    patches = jnp.stack(cols, axis=3).reshape(N * Ho * Wo, 9 * C)
    y = matmul_op(patches, p["wm"], p["b"], pre_act=pre_act)
    return y.reshape(N, Ho, Wo, Cout)


def upsample_nearest2x(x):
    return jnp.repeat(jnp.repeat(x, 2, axis=1), 2, axis=2)   # NHWC nearest-neighbor x2


# --------------------------------------------------------------------------------------
# Deterministic parameter init (weights stored matmul-ready; biases = 0, norms = identity)
# --------------------------------------------------------------------------------------

_KEY = [jax.random.PRNGKey(1234)]


def _next_key():
    _KEY[0], sub = jax.random.split(_KEY[0])
    return sub


def init_linear(in_f, out_f, bias=True):
    bound = 1.0 / math.sqrt(in_f)
    w = jax.random.uniform(_next_key(), (out_f, in_f), jnp.float32, -bound, bound)
    b = jnp.zeros((out_f,), jnp.float32)      # zeros also when bias=False (adds nothing)
    return {"wm": jnp.transpose(w), "b": b}   # (in_f, out_f), matmul-ready


def init_conv(in_c, out_c, k):
    fan_in = in_c * k * k
    bound = 1.0 / math.sqrt(fan_in)
    w = jax.random.uniform(_next_key(), (out_c, in_c, k, k), jnp.float32, -bound, bound)
    if k == 1:
        wm = jnp.transpose(w.reshape(out_c, in_c))                        # (Cin, Cout)
    else:
        wm = jnp.transpose(w, (2, 3, 1, 0)).reshape(k * k * in_c, out_c)  # (9*Cin, Cout)
    return {"wm": wm, "b": jnp.zeros((out_c,), jnp.float32)}


def init_norm(c):
    return {"g": jnp.ones((c,), jnp.float32), "b": jnp.zeros((c,), jnp.float32)}


def init_residual(in_c, out_c, n_time=640):
    # NOTE: groupnorm_feature / silu exist in the torch __init__ but are unused in forward -> omitted.
    return {
        "conv_feature": init_conv(in_c, out_c, 3),
        "linear_time": init_linear(n_time, out_c),
        "gn_merged": init_norm(out_c),
        "conv_merged": init_conv(out_c, out_c, 3),
        "res": None if in_c == out_c else init_conv(in_c, out_c, 1),
    }


def init_attention_block(n_head, n_embd):
    C = n_head * n_embd
    return {
        "n_head": n_head,
        "gn": init_norm(C),
        "conv_input": init_conv(C, C, 1),
        "ln1": init_norm(C),
        "attn": {
            "in_proj": init_linear(C, 3 * C, bias=False),   # SelfAttention(n_head, C, in_proj_bias=False)
            "out_proj": init_linear(C, C, bias=True),
        },
        "ln2": init_norm(C),
        "geglu1": init_linear(C, 4 * C * 2),
        "geglu2": init_linear(4 * C, C),
        "conv_output": init_conv(C, C, 1),
    }


def init_unet():
    enc = [
        [("conv", init_conv(32, 320, 3), 1)],
        [("res", init_residual(320, 320)), ("attn", init_attention_block(8, 40))],
        [("res", init_residual(320, 320)), ("attn", init_attention_block(8, 40))],
        [("conv", init_conv(320, 320, 3), 2)],
        [("res", init_residual(320, 640)), ("attn", init_attention_block(8, 80))],
        [("res", init_residual(640, 640)), ("attn", init_attention_block(8, 80))],
        [("conv", init_conv(640, 640, 3), 2)],
        [("res", init_residual(640, 1280)), ("attn", init_attention_block(8, 160))],
        [("res", init_residual(1280, 1280)), ("attn", init_attention_block(8, 160))],
        [("conv", init_conv(1280, 1280, 3), 2)],
        [("res", init_residual(1280, 1280))],
        [("res", init_residual(1280, 1280))],
    ]
    bottleneck = [
        ("res", init_residual(1280, 1280)),
        ("attn", init_attention_block(8, 160)),
        ("res", init_residual(1280, 1280)),
    ]
    dec = [
        [("res", init_residual(2560, 1280))],
        [("res", init_residual(2560, 1280))],
        [("res", init_residual(2560, 1280)), ("up", init_conv(1280, 1280, 3))],
        [("res", init_residual(2560, 1280)), ("attn", init_attention_block(8, 160))],
        [("res", init_residual(2560, 1280)), ("attn", init_attention_block(8, 160))],
        [("res", init_residual(1920, 1280)), ("attn", init_attention_block(8, 160)),
         ("up", init_conv(1280, 1280, 3))],
        [("res", init_residual(1920, 640)), ("attn", init_attention_block(8, 80))],
        [("res", init_residual(1280, 640)), ("attn", init_attention_block(8, 80))],
        [("res", init_residual(960, 640)), ("attn", init_attention_block(8, 80)),
         ("up", init_conv(640, 640, 3))],
        [("res", init_residual(960, 320)), ("attn", init_attention_block(8, 40))],
        [("res", init_residual(640, 320)), ("attn", init_attention_block(8, 40))],
        [("res", init_residual(640, 320)), ("attn", init_attention_block(8, 40))],
    ]
    return {"enc": enc, "bottleneck": bottleneck, "dec": dec}


# --------------------------------------------------------------------------------------
# Forward passes (mirroring the PyTorch modules; activations NHWC internally)
# --------------------------------------------------------------------------------------

def self_attention_fwd(p, x, n_heads):
    """SelfAttention forward (no causal mask). x: (N, S, C)."""
    N, S, C = x.shape
    dh = C // n_heads
    qkv = matmul_op(x.reshape(N * S, C), p["in_proj"]["wm"], p["in_proj"]["b"])   # (N*S, 3C)
    qkv = qkv.reshape(N, S, 3, n_heads, dh)
    q = jnp.transpose(qkv[:, :, 0], (0, 2, 1, 3))       # (N, H, S, dh)
    k = jnp.transpose(qkv[:, :, 1], (0, 2, 1, 3))
    v = jnp.transpose(qkv[:, :, 2], (0, 2, 1, 3))
    o = attention_core_op(q, k, v, scale=1.0 / math.sqrt(dh))
    o = jnp.transpose(o, (0, 2, 1, 3)).reshape(N * S, C)
    o = matmul_op(o, p["out_proj"]["wm"], p["out_proj"]["b"])
    return o.reshape(N, S, C)


def attention_block_fwd(p, x):
    residue_long = x                                           # NHWC
    h = groupnorm_op(x, p["gn"]["g"], p["gn"]["b"], eps=1e-6)
    h = conv2d(p["conv_input"], h)                             # 1x1
    N, H, W, C = h.shape
    S = H * W
    h = h.reshape(N, S, C)

    residue_short = h
    hn = layernorm_op(h.reshape(N * S, C), p["ln1"]["g"], p["ln1"]["b"], eps=1e-5).reshape(N, S, C)
    h = self_attention_fwd(p["attn"], hn, p["n_head"]) + residue_short

    residue_short = h
    hn = layernorm_op(h.reshape(N * S, C), p["ln2"]["g"], p["ln2"]["b"], eps=1e-5)
    hg = matmul_op(hn, p["geglu1"]["wm"], p["geglu1"]["b"])    # (N*S, 8C)
    a, gate = hg[:, :4 * C], hg[:, 4 * C:]
    # TODO(synk): exact erf-GELU of the gate stays in plain JAX glue (erf lowering in Mosaic
    # is not guaranteed); everything around it runs in the Pallas matmul kernels.
    a = a * jax.nn.gelu(gate, approximate=False)
    h = matmul_op(a, p["geglu2"]["wm"], p["geglu2"]["b"]).reshape(N, S, C) + residue_short

    h = h.reshape(N, H, W, C)
    return conv2d(p["conv_output"], h) + residue_long


def residual_block_fwd(p, feature, time):
    residue = feature
    f = conv2d(p["conv_feature"], feature, pre_act="leaky")        # LeakyReLU fused in-kernel
    t = matmul_op(time, p["linear_time"]["wm"], p["linear_time"]["b"], pre_act="leaky")  # (1, Cout)
    merged = f + t[:, None, None, :]
    merged = groupnorm_op(merged, p["gn_merged"]["g"], p["gn_merged"]["b"],
                          eps=1e-5, act="leaky")                   # GroupNorm + LeakyReLU fused
    merged = conv2d(p["conv_merged"], merged)
    res = residue if p["res"] is None else conv2d(p["res"], residue)
    return merged + res


def apply_layer(layer, x, time):
    kind = layer[0]
    if kind == "conv":
        return conv2d(layer[1], x, stride=layer[2])
    if kind == "res":
        return residual_block_fwd(layer[1], x, time)
    if kind == "attn":
        return attention_block_fwd(layer[1], x)
    if kind == "up":
        return conv2d(layer[1], upsample_nearest2x(x))
    raise ValueError(kind)


def unet_fwd(params, x_nchw, time):
    x = jnp.transpose(x_nchw, (0, 2, 3, 1))        # NCHW -> NHWC once at the model boundary
    skips = []
    for block in params["enc"]:
        for layer in block:
            x = apply_layer(layer, x, time)
        skips.append(x)
    for layer in params["bottleneck"]:
        x = apply_layer(layer, x, time)
    for block in params["dec"]:
        x = jnp.concatenate([x, skips.pop()], axis=-1)   # torch cat dim=1 == channel axis
        for layer in block:
            x = apply_layer(layer, x, time)
    return jnp.transpose(x, (0, 3, 1, 2))          # back to NCHW


# --------------------------------------------------------------------------------------
# main
# --------------------------------------------------------------------------------------

if __name__ == "__main__":
    key = jax.random.PRNGKey(0)
    kx, kt = jax.random.split(key)
    # forward implies: x has 32 input channels (first conv is 32->320), time embedding is 640-d.
    x = jax.random.normal(kx, (1, 32, 16, 16), jnp.float32)    # NCHW, like the torch module
    time = jax.random.normal(kt, (1, 640), jnp.float32)

    params = init_unet()
    out = unet_fwd(params, x, time)
    out = jax.block_until_ready(out)

    assert out.shape == (1, 320, 16, 16), out.shape
    assert bool(jnp.all(jnp.isfinite(out)))
    print("KERNEL_OK")
</pallas_src>

<mosaic_0001>
module attributes {stable_mosaic.version = 11 : i64} {
  func.func @_matmul_single_kernel(%arg0: i32, %arg1: i32, %arg2: memref<256x288xf32, #tpu.memory_space<vmem>>, %arg3: memref<288x320xf32, #tpu.memory_space<vmem>>, %arg4: memref<1x320xf32, #tpu.memory_space<vmem>>, %arg5: memref<256x320xf32, #tpu.memory_space<vmem>>) attributes {dimension_semantics = [#tpu.dimension_semantics<parallel>, #tpu.dimension_semantics<parallel>], iteration_bounds = array<i64: 1, 1>, scalar_prefetch = 0 : i64, scratch_operands = 0 : i64, tpu.core_type = #tpu.core_type<tc>, window_params = [{transform_indices = @transform_0, window_bounds = array<i64: 256, 288>}, {transform_indices = @transform_1, window_bounds = array<i64: 288, 320>}, {transform_indices = @transform_2, window_bounds = array<i64: 1, 320>}, {transform_indices = @transform_3, window_bounds = array<i64: 256, 320>}]} {
    %c0 = arith.constant 0 : index
    %c0_0 = arith.constant 0 : index
    %0 = vector.load %arg2[%c0, %c0_0] : memref<256x288xf32, #tpu.memory_space<vmem>>, vector<256x288xf32>
    %c0_1 = arith.constant 0 : index
    %c0_2 = arith.constant 0 : index
    %1 = vector.load %arg3[%c0_1, %c0_2] : memref<288x320xf32, #tpu.memory_space<vmem>>, vector<288x320xf32>
    %cst = arith.constant dense<0.000000e+00> : vector<256x320xf32>
    %2 = tpu.matmul %0, %1, %cst {dimension_numbers = #tpu.dot_dimension_numbers<[1], [0], [0], [1], [0, 0, 1, 1], [], []>} : vector<256x288xf32>, vector<288x320xf32>, vector<256x320xf32> -> vector<256x320xf32>
    %c0_3 = arith.constant 0 : index
    %c0_4 = arith.constant 0 : index
    %3 = vector.load %arg4[%c0_3, %c0_4] : memref<1x320xf32, #tpu.memory_space<vmem>>, vector<1x320xf32>
    %4 = vector.broadcast %3 : vector<1x320xf32> to vector<256x320xf32>
    %5 = arith.addf %2, %4 : vector<256x320xf32>
    %c0_5 = arith.constant 0 : index
    %c0_6 = arith.constant 0 : index
    %6 = vector.load %arg5[%c0_5, %c0_6] : memref<256x320xf32, #tpu.memory_space<vmem>>, vector<256x320xf32>
    tpu.vector_store %arg5[%c0_5, %c0_6], %5 {strides = array<i32>} : memref<256x320xf32, #tpu.memory_space<vmem>>, vector<256x320xf32>,
    return
  }
  func.func @transform_0(%arg0: i32, %arg1: i32) -> (i32, i32) {
    %c0_i32 = arith.constant 0 : i32
    %c0_i32_0 = arith.constant 0 : i32
    return %arg0, %c0_i32 : i32, i32
  }
  func.func @transform_1(%arg0: i32, %arg1: i32) -> (i32, i32) {
    %c0_i32 = arith.constant 0 : i32
    %c0_i32_0 = arith.constant 0 : i32
    return %c0_i32, %arg1 : i32, i32
  }
  func.func @transform_2(%arg0: i32, %arg1: i32) -> (i32, i32) {
    %c0_i32 = arith.constant 0 : i32
    %c0_i32_0 = arith.constant 0 : i32
    return %c0_i32, %arg1 : i32, i32
  }
  func.func @transform_3(%arg0: i32, %arg1: i32) -> (i32, i32) {
    %c0_i32 = arith.constant 0 : i32
    return %arg0, %arg1 : i32, i32
  }
}

</mosaic_0001>

<llo_original>
// kernel: matmul_op.1
$region0: #{matmul_op.1}
  #allocation0 [shape = 'u32[]', space=smem, size = 0x4, offset = 0x4, fixed_abs, tag = 'smem constant byte address 0x4 - core index']
  #allocation1 [shape = 'u32[144,128]{1,0:T(1,128)}', space=vmem, size = 0x12000, scoped, tag = 'internal scratch']
  %s0 = inlined_call_operand.vmem [shape: f32[256,288], index: 0, kind: input, shape index: {}]
  %s1 = inlined_call_operand.vmem [shape: f32[288,320], index: 1, kind: input, shape index: {}]
  %s2 = inlined_call_operand.vmem [shape: f32[1,320], index: 2, kind: input, shape index: {}]
  %s3 = inlined_call_operand.vmem [shape: f32[256,320], index: 3, kind: output, shape index: {}]
  %s4 = sld [smem:[#allocation0]]
  $region22: #{matmul_op.1} parent=0
    _
  %s6 = ssub.s32 1, %s4
  %s7 = scalar_select 0, %s6, %s4
  // Predicated region
  $region2: #{matmul_op.1} parent=0 // pred_check
    _
  $region3: #{matmul_op.1} parent=0 // pred_check_branch
    %9 = sbr.rel (0) target = $region5
  $region4: #{matmul_op.1} parent=0 // pred_region
    _
  $region5: #{matmul_op.1} parent=0 // pred_fallthru
    _
  // Predicated region
  $region6: #{matmul_op.1} parent=0 // pred_check
    _
  $region7: #{matmul_op.1} parent=0 // pred_check_branch
    %11 = sbr.rel (0) target = $region9
  $region8: #{matmul_op.1} parent=0 // pred_region
    _
  $region9: #{matmul_op.1} parent=0 // pred_fallthru
    _
  // Predicated region
  $region10: #{matmul_op.1} parent=0 // pred_check
    _
  $region11: #{matmul_op.1} parent=0 // pred_check_branch
    %13 = sbr.rel (0) target = $region13
  $region12: #{matmul_op.1} parent=0 // pred_region
    _
  $region13: #{matmul_op.1} parent=0 // pred_fallthru
    _
  %v14 = vld [vmem:[%s0] sm:$0xff]
  %v15 = vld [vmem:[%s0 + $0x8] sm:$0xff]
  %v16 = vld [vmem:[%s0 + $0x10] sm:$0xff]
  %v17 = vld [vmem:[%s0 + $0x18] sm:$0xff]
  %v18 = vld [vmem:[%s0 + $0x20] sm:$0xff]
  %v19 = vld [vmem:[%s0 + $0x28] sm:$0xff]
  %v20 = vld [vmem:[%s0 + $0x30] sm:$0xff]
  %v21 = vld [vmem:[%s0 + $0x38] sm:$0xff]
  %v22 = vld [vmem:[%s0 + $0x40] sm:$0xff]
  %v23 = vld [vmem:[%s0 + $0x48] sm:$0xff]
  %v24 = vld [vmem:[%s0 + $0x50] sm:$0xff]
  %v25 = vld [vmem:[%s0 + $0x58] sm:$0xff]
  %v26 = vld [vmem:[%s0 + $0x60] sm:$0xff]
  %v27 = vld [vmem:[%s0 + $0x68] sm:$0xff]
  %v28 = vld [vmem:[%s0 + $0x70] sm:$0xff]
  %v29 = vld [vmem:[%s0 + $0x78] sm:$0xff]
  %v30 = vld [vmem:[%s0 + $0x80] sm:$0xff]
  %v31 = vld [vmem:[%s0 + $0x88] sm:$0xff]
  %v32 = vld [vmem:[%s0 + $0x90] sm:$0xff]
  %v33 = vld [vmem:[%s0 + $0x98] sm:$0xff]
  %v34 = vld [vmem:[%s0 + $0xa0] sm:$0xff]
  %v35 = vld [vmem:[%s0 + $0xa8] sm:$0xff]
  %v36 = vld [vmem:[%s0 + $0xb0] sm:$0xff]
  %v37 = vld [vmem:[%s0 + $0xb8] sm:$0xff]
  %v38 = vld [vmem:[%s0 + $0xc0] sm:$0xff]
  %v39 = vld [vmem:[%s0 + $0xc8] sm:$0xff]
  %v40 = vld [vmem:[%s0 + $0xd0] sm:$0xff]
  %v41 = vld [vmem:[%s0 + $0xd8] sm:$0xff]
  %v42 = vld [vmem:[%s0 + $0xe0] sm:$0xff]
  %v43 = vld [vmem:[%s0 + $0xe8] sm:$0xff]
  %v44 = vld [vmem:[%s0 + $0xf0] sm:$0xff]
  %v45 = vld [vmem:[%s0 + $0xf8] sm:$0xff]
  %v46 = vld [vmem:[%s0 + $0x100] sm:$0xff]
  %v47 = vld [vmem:[%s0 + $0x108] sm:$0xff]
  %v48 = vld [vmem:[%s0 + $0x110] sm:$0xff]
  %v49 = vld [vmem:[%s0 + $0x118] sm:$0xff]
  %v50 = vld [vmem:[%s0 + $0x120] sm:$0xff]
  %v51 = vld [vmem:[%s0 + $0x128] sm:$0xff]
  %v52 = vld [vmem:[%s0 + $0x130] sm:$0xff]
  %v53 = vld [vmem:[%s0 + $0x138] sm:$0xff]
  %v54 = vld [vmem:[%s0 + $0x140] sm:$0xff]
  %v55 = vld [vmem:[%s0 + $0x148] sm:$0xff]
  %v56 = vld [vmem:[%s0 + $0x150] sm:$0xff]
  %v57 = vld [vmem:[%s0 + $0x158] sm:$0xff]
  %v58 = vld [vmem:[%s0 + $0x160] sm:$0xff]
  %v59 = vld [vmem:[%s0 + $0x168] sm:$0xff]
  %v60 = vld [vmem:[%s0 + $0x170] sm:$0xff]
  %v61 = vld [vmem:[%s0 + $0x178] sm:$0xff]
  %v62 = vld [vmem:[%s0 + $0x180] sm:$0xff]
  %v63 = vld [vmem:[%s0 + $0x188] sm:$0xff]
  %v64 = vld [vmem:[%s0 + $0x190] sm:$0xff]
  %v65 = vld [vmem:[%s0 + $0x198] sm:$0xff]
  %v66 = vld [vmem:[%s0 + $0x1a0] sm:$0xff]
  %v67 = vld [vmem:[%s0 + $0x1a8] sm:$0xff]
  %v68 = vld [vmem:[%s0 + $0x1b0] sm:$0xff]
  %v69 = vld [vmem:[%s0 + $0x1b8] sm:$0xff]
  %v70 = vld [vmem:[%s0 + $0x1c0] sm:$0xff]
  %v71 = vld [vmem:[%s0 + $0x1c8] sm:$0xff]
  %v72 = vld [vmem:[%s0 + $0x1d0] sm:$0xff]
  %v73 = vld [vmem:[%s0 + $0x1d8] sm:$0xff]
  %v74 = vld [vmem:[%s0 + $0x1e0] sm:$0xff]
  %v75 = vld [vmem:[%s0 + $0x1e8] sm:$0xff]
  %v76 = vld [vmem:[%s0 + $0x1f0] sm:$0xff]
  %v77 = vld [vmem:[%s0 + $0x1f8] sm:$0xff]
  %v78 = vld [vmem:[%s0 + $0x200] sm:$0xff]
  %v79 = vld [vmem:[%s0 + $0x208] sm:$0xff]
  %v80 = vld [vmem:[%s0 + $0x210] sm:$0xff]
  %v81 = vld [vmem:[%s0 + $0x218] sm:$0xff]
  %v82 = vld [vmem:[%s0 + $0x220] sm:$0xff]
  %v83 = vld [vmem:[%s0 + $0x228] sm:$0xff]
  %v84 = vld [vmem:[%s0 + $0x230] sm:$0xff]
  %v85 = vld [vmem:[%s0 + $0x238] sm:$0xff]
  %v86 = vld [vmem:[%s0 + $0x240] sm:$0xff]
  %v87 = vld [vmem:[%s0 + $0x248] sm:$0xff]
  %v88 = vld [vmem:[%s0 + $0x250] sm:$0xff]
  %v89 = vld [vmem:[%s0 + $0x258] sm:$0xff]
  %v90 = vld [vmem:[%s0 + $0x260] sm:$0xff]
  %v91 = vld [vmem:[%s0 + $0x268] sm:$0xff]
  %v92 = vld [vmem:[%s0 + $0x270] sm:$0xff]
  %v93 = vld [vmem:[%s0 + $0x278] sm:$0xff]
  %v94 = vld [vmem:[%s0 + $0x280] sm:$0xff]
  %v95 = vld [vmem:[%s0 + $0x288] sm:$0xff]
  %v96 = vld [vmem:[%s0 + $0x290] sm:$0xff]
  %v97 = vld [vmem:[%s0 + $0x298] sm:$0xff]
  %v98 = vld [vmem:[%s0 + $0x2a0] sm:$0xff]
  %v99 = vld [vmem:[%s0 + $0x2a8] sm:$0xff]
  %v100 = vld [vmem:[%s0 + $0x2b0] sm:$0xff]
  %v101 = vld [vmem:[%s0 + $0x2b8] sm:$0xff]
  %v102 = vld [vmem:[%s0 + $0x2c0] sm:$0xff]
  %v103 = vld [vmem:[%s0 + $0x2c8] sm:$0xff]
  %v104 = vld [vmem:[%s0 + $0x2d0] sm:$0xff]
  %v105 = vld [vmem:[%s0 + $0x2d8] sm:$0xff]
  %v106 = vld [vmem:[%s0 + $0x2e0] sm:$0xff]
  %v107 = vld [vmem:[%s0 + $0x2e8] sm:$0xff]
  %v108 = vld [vmem:[%s0 + $0x2f0] sm:$0xff]
  %v109 = vld [vmem:[%s0 + $0x2f8] sm:$0xff]
  %v110 = vld [vmem:[%s1] sm:$0xff]
  %v111 = vld [vmem:[%s1 + $0x8] sm:$0xff]
  %v112 = vld [vmem:[%s1 + $0x10] sm:$0xff]
  %v113 = vld [vmem:[%s1 + $0x18] sm:$0xff]
  %v114 = vld [vmem:[%s1 + $0x20] sm:$0xff]
  %v115 = vld [vmem:[%s1 + $0x28] sm:$0xff]
  %v116 = vld [vmem:[%s1 + $0x30] sm:$0xff]
  %v117 = vld [vmem:[%s1 + $0x38] sm:$0xff]
  %v118 = vld [vmem:[%s1 + $0x40] sm:$0xff]
  %v119 = vld [vmem:[%s1 + $0x48] sm:$0xff]
  %v120 = vld [vmem:[%s1 + $0x50] sm:$0xff]
  %v121 = vld [vmem:[%s1 + $0x58] sm:$0xff]
  %v122 = vld [vmem:[%s1 + $0x60] sm:$0xff]
  %v123 = vld [vmem:[%s1 + $0x68] sm:$0xff]
  %v124 = vld [vmem:[%s1 + $0x70] sm:$0xff]
  %v125 = vld [vmem:[%s1 + $0x78] sm:$0xff]
  %v126 = vld [vmem:[%s1 + $0x80] sm:$0xff]
  %v127 = vld [vmem:[%s1 + $0x88] sm:$0xff]
  %v128 = vld [vmem:[%s1 + $0x90] sm:$0xff]
  %v129 = vld [vmem:[%s1 + $0x98] sm:$0xff]
  %v130 = vld [vmem:[%s1 + $0xa0] sm:$0xff]
  %v131 = vld [vmem:[%s1 + $0xa8] sm:$0xff]
  %v132 = vld [vmem:[%s1 + $0xb0] sm:$0xff]
  %v133 = vld [vmem:[%s1 + $0xb8] sm:$0xff]
  %v134 = vld [vmem:[%s1 + $0xc0] sm:$0xff]
  %v135 = vld [vmem:[%s1 + $0xc8] sm:$0xff]
  %v136 = vld [vmem:[%s1 + $0xd0] sm:$0xff]
  %v137 = vld [vmem:[%s1 + $0xd8] sm:$0xff]
  %v138 = vld [vmem:[%s1 + $0xe0] sm:$0xff]
  %v139 = vld [vmem:[%s1 + $0xe8] sm:$0xff]
  %v140 = vld [vmem:[%s1 + $0xf0] sm:$0xff]
  %v141 = vld [vmem:[%s1 + $0xf8] sm:$0xff]
  %v142 = vld [vmem:[%s1 + $0x100] sm:$0xff]
  %v143 = vld [vmem:[%s1 + $0x108] sm:$0xff]
  %v144 = vld [vmem:[%s1 + $0x110] sm:$0xff]
  %v145 = vld [vmem:[%s1 + $0x118] sm:$0xff]
  %v146 = vld [vmem:[%s1 + $0x120] sm:$0xff]
  %v147 = vld [vmem:[%s1 + $0x128] sm:$0xff]
  %v148 = vld [vmem:[%s1 + $0x130] sm:$0xff]
  %v149 = vld [vmem:[%s1 + $0x138] sm:$0xff]
  %v150 = vld [vmem:[%s1 + $0x140] sm:$0xff]
  %v151 = vld [vmem:[%s1 + $0x148] sm:$0xff]
  %v152 = vld [vmem:[%s1 + $0x150] sm:$0xff]
  %v153 = vld [vmem:[%s1 + $0x158] sm:$0xff]
  %v154 = vld [vmem:[%s1 + $0x160] sm:$0xff]
  %v155 = vld [vmem:[%s1 + $0x168] sm:$0xff]
  %v156 = vld [vmem:[%s1 + $0x170] sm:$0xff]
  %v157 = vld [vmem:[%s1 + $0x178] sm:$0xff]
  %v158 = vld [vmem:[%s1 + $0x180] sm:$0xff]
  %v159 = vld [vmem:[%s1 + $0x188] sm:$0xff]
  %v160 = vld [vmem:[%s1 + $0x190] sm:$0xff]
  %v161 = vld [vmem:[%s1 + $0x198] sm:$0xff]
  %v162 = vld [vmem:[%s1 + $0x1a0] sm:$0xff]
  %v163 = vld [vmem:[%s1 + $0x1a8] sm:$0xff]
  %v164 = vld [vmem:[%s1 + $0x1b0] sm:$0xff]
  %v165 = vld [vmem:[%s1 + $0x1b8] sm:$0xff]
  %v166 = vld [vmem:[%s1 + $0x1c0] sm:$0xff]
  %v167 = vld [vmem:[%s1 + $0x1c8] sm:$0xff]
  %v168 = vld [vmem:[%s1 + $0x1d0] sm:$0xff]
  %v169 = vld [vmem:[%s1 + $0x1d8] sm:$0xff]
  %v170 = vld [vmem:[%s1 + $0x1e0] sm:$0xff]
  %v171 = vld [vmem:[%s1 + $0x1e8] sm:$0xff]
  %v172 = vld [vmem:[%s1 + $0x1f0] sm:$0xff]
  %v173 = vld [vmem:[%s1 + $0x1f8] sm:$0xff]
  %v174 = vld [vmem:[%s1 + $0x200] sm:$0xff]
  %v175 = vld [vmem:[%s1 + $0x208] sm:$0xff]
  %v176 = vld [vmem:[%s1 + $0x210] sm:$0xff]
  %v177 = vld [vmem:[%s1 + $0x218] sm:$0xff]
  %v178 = vld [vmem:[%s1 + $0x220] sm:$0xff]
  %v179 = vld [vmem:[%s1 + $0x228] sm:$0xff]
  %v180 = vld [vmem:[%s1 + $0x230] sm:$0xff]
  %v181 = vld [vmem:[%s1 + $0x238] sm:$0xff]
  %v182 = vld [vmem:[%s1 + $0x240] sm:$0xff]
  %v183 = vld [vmem:[%s1 + $0x248] sm:$0xff]
  %v184 = vld [vmem:[%s1 + $0x250] sm:$0xff]
  %v185 = vld [vmem:[%s1 + $0x258] sm:$0xff]
  %v186 = vld [vmem:[%s1 + $0x260] sm:$0xff]
  %v187 = vld [vmem:[%s1 + $0x268] sm:$0xff]
  %v188 = vld [vmem:[%s1 + $0x270] sm:$0xff]
  %v189 = vld [vmem:[%s1 + $0x278] sm:$0xff]
  %v190 = vld [vmem:[%s1 + $0x280] sm:$0xff]
  %v191 = vld [vmem:[%s1 + $0x288] sm:$0xff]
  %v192 = vld [vmem:[%s1 + $0x290] sm:$0xff]
  %v193 = vld [vmem:[%s1 + $0x298] sm:$0xff]
  %v194 = vld [vmem:[%s1 + $0x2a0] sm:$0xff]
  %v195 = vld [vmem:[%s1 + $0x2a8] sm:$0xff]
  %v196 = vld [vmem:[%s1 + $0x2b0] sm:$0xff]
  %v197 = vld [vmem:[%s1 + $0x2b8] sm:$0xff]
  %v198 = vld [vmem:[%s1 + $0x2c0] sm:$0xff]
  %v199 = vld [vmem:[%s1 + $0x2c8] sm:$0xff]
  %v200 = vld [vmem:[%s1 + $0x2d0] sm:$0xff]
  %v201 = vld [vmem:[%s1 + $0x2d8] sm:$0xff]
  %v202 = vld [vmem:[%s1 + $0x2e0] sm:$0xff]
  %v203 = vld [vmem:[%s1 + $0x2e8] sm:$0xff]
  %v204 = vld [vmem:[%s1 + $0x2f0] sm:$0xff]
  %v205 = vld [vmem:[%s1 + $0x2f8] sm:$0xff]
  %v206 = vld [vmem:[%s1 + $0x300] sm:$0xff]
  %v207 = vld [vmem:[%s1 + $0x308] sm:$0xff]
  %v208 = vld [vmem:[%s1 + $0x310] sm:$0xff]
  %v209 = vld [vmem:[%s1 + $0x318] sm:$0xff]
  %v210 = vld [vmem:[%s1 + $0x320] sm:$0xff]
  %v211 = vld [vmem:[%s1 + $0x328] sm:$0xff]
  %v212 = vld [vmem:[%s1 + $0x330] sm:$0xff]
  %v213 = vld [vmem:[%s1 + $0x338] sm:$0xff]
  %v214 = vld [vmem:[%s1 + $0x340] sm:$0xff]
  %v215 = vld [vmem:[%s1 + $0x348] sm:$0xff]
  %v216 = vld [vmem:[%s1 + $0x350] sm:$0xff]
  %v217 = vld [vmem:[%s1 + $0x358] sm:$0xff]
  %v218 = vld [vmem:[%s2] sm:$0x7]
  %v220 = vlaneseq
  %v221 = vshrl.u32 %v220, 7
  %v222 = vsub.s32 0, %v221
  %v223 = vrot.slane %v218, %v222
  %v224 = vlaneseq
  %v225 = vshrl.u32 %v224, 7
  %v226 = vsub.s32 1, %v225
  %v227 = vrot.slane %v218, %v226
  %v228 = vlaneseq
  %v229 = vshrl.u32 %v228, 7
  %v230 = vsub.s32 2, %v229
  %v231 = vrot.slane %v218, %v230
  %vm235 = vcmask 261120
  %v237 = vsel %vm235, %v16, 0
  %v240 = vsel %vm235, %v19, 0
  %v243 = vsel %vm235, %v22, 0
  %v246 = vsel %vm235, %v25, 0
  %v249 = vsel %vm235, %v28, 0
  %v252 = vsel %vm235, %v31, 0
  %v255 = vsel %vm235, %v34, 0
  %v258 = vsel %vm235, %v37, 0
  %v261 = vsel %vm235, %v40, 0
  %v264 = vsel %vm235, %v43, 0
  %v267 = vsel %vm235, %v46, 0
  %v270 = vsel %vm235, %v49, 0
  %v273 = vsel %vm235, %v52, 0
  %v276 = vsel %vm235, %v55, 0
  %v279 = vsel %vm235, %v58, 0
  %v282 = vsel %vm235, %v61, 0
  %v285 = vsel %vm235, %v64, 0
  %v288 = vsel %vm235, %v67, 0
  %v291 = vsel %vm235, %v70, 0
  %v294 = vsel %vm235, %v73, 0
  %v297 = vsel %vm235, %v76, 0
  %v300 = vsel %vm235, %v79, 0
  %v303 = vsel %vm235, %v82, 0
  %v306 = vsel %vm235, %v85, 0
  %v309 = vsel %vm235, %v88, 0
  %v312 = vsel %vm235, %v91, 0
  %v315 = vsel %vm235, %v94, 0
  %v318 = vsel %vm235, %v97, 0
  %v321 = vsel %vm235, %v100, 0
  %v324 = vsel %vm235, %v103, 0
  %v327 = vsel %vm235, %v106, 0
  %v330 = vsel %vm235, %v109, 0
  %332 = vmatprep.subr.mxu0 %v156
  %333 = vmatpush1.msra.mxu0 %v155
  %334 = vmatprep.subr.mxu0 %v153
  %335 = vmatpush1.msra.mxu0 %v152
  %336 = vmatprep.subr.mxu0 %v150
  %337 = vmatpush1.msra.mxu0 %v149
  %338 = vmatprep.subr.mxu0 %v147
  %339 = vmatpush1.msra.mxu0 %v146
  %340 = vmatprep.subr.mxu0 %v144
  %341 = vmatpush1.msra.mxu0 %v143
  %342 = vmatprep.subr.mxu0 %v141
  %343 = vmatpush1.msra.mxu0 %v140
  %344 = vmatprep.subr.mxu0 %v138
  %345 = vmatpush1.msra.mxu0 %v137
  %346 = vmatprep.subr.mxu0 %v135
  %347 = vmatpush1.msra.mxu0 %v134
  %348 = vmatprep.subr.mxu0 %v132
  %349 = vmatpush1.msra.mxu0 %v131
  %350 = vmatprep.subr.mxu0 %v129
  %351 = vmatpush1.msra.mxu0 %v128
  %352 = vmatprep.subr.mxu0 %v126
  %353 = vmatpush1.msra.mxu0 %v125
  %354 = vmatprep.subr.mxu0 %v123
  %355 = vmatpush1.msra.mxu0 %v122
  %356 = vmatprep.subr.mxu0 %v120
  %357 = vmatpush1.msra.mxu0 %v119
  %358 = vmatprep.subr.mxu0 %v117
  %359 = vmatpush1.msra.mxu0 %v116
  %360 = vmatprep.subr.mxu0 %v114
  %361 = vmatpush1.msra.mxu0 %v113
  %362 = vmatprep.subr.mxu0 %v111
  %363 = vmatpush1.msra.mxu0 %v110
  %364 = vmatprep.subr.mxu0 %v204
  %365 = vmatpush2.msra.mxu0 %v203
  %366 = vmatprep.subr.mxu0 %v201
  %367 = vmatpush2.msra.mxu0 %v200
  %368 = vmatprep.subr.mxu0 %v198
  %369 = vmatpush2.msra.mxu0 %v197
  %370 = vmatprep.subr.mxu0 %v195
  %371 = vmatpush2.msra.mxu0 %v194
  %372 = vmatprep.subr.mxu0 %v192
  %373 = vmatpush2.msra.mxu0 %v191
  %374 = vmatprep.subr.mxu0 %v189
  %375 = vmatpush2.msra.mxu0 %v188
  %376 = vmatprep.subr.mxu0 %v186
  %377 = vmatpush2.msra.mxu0 %v185
  %378 = vmatprep.subr.mxu0 %v183
  %379 = vmatpush2.msra.mxu0 %v182
  %380 = vmatprep.subr.mxu0 %v180
  %381 = vmatpush2.msra.mxu0 %v179
  %382 = vmatprep.subr.mxu0 %v177
  %383 = vmatpush2.msra.mxu0 %v176
  %384 = vmatprep.subr.mxu0 %v174
  %385 = vmatpush2.msra.mxu0 %v173
  %386 = vmatprep.subr.mxu0 %v171
  %387 = vmatpush2.msra.mxu0 %v170
  %388 = vmatprep.subr.mxu0 %v168
  %389 = vmatpush2.msra.mxu0 %v167
  %390 = vmatprep.subr.mxu0 %v165
  %391 = vmatpush2.msra.mxu0 %v164
  %392 = vmatprep.subr.mxu0 %v162
  %393 = vmatpush2.msra.mxu0 %v161
  %394 = vmatprep.subr.mxu0 %v159
  %395 = vmatpush2.msra.mxu0 %v158
  %396 = vmatprep.mubr.f32.mxu0 %v15
  %397 = vmatmul.mubr.f32.gmra.mxu0 %v14
  %v398 = vpop.f32.mrf.mxu0
  %v399 = vadd.f32 %v223, %v398
  %v400 = vpop.f32.mrf.mxu0
  %v401 = vadd.f32 %v227, %v400
  %402 = vmatprep.mubr.f32.mxu0 %v18
  %403 = vmatmul.mubr.f32.gmra.mxu0 %v17
  %v404 = vpop.f32.mrf.mxu0
  %v405 = vadd.f32 %v223, %v404
  %v406 = vpop.f32.mrf.mxu0
  %v407 = vadd.f32 %v227, %v406
  %408 = vmatprep.mubr.f32.mxu0 %v21
  %409 = vmatmul.mubr.f32.gmra.mxu0 %v20
  %v410 = vpop.f32.mrf.mxu0
  %v411 = vadd.f32 %v223, %v410
  %v412 = vpop.f32.mrf.mxu0
  %v413 = vadd.f32 %v227, %v412
  %414 = vmatprep.mubr.f32.mxu0 %v24
  %415 = vmatmul.mubr.f32.gmra.mxu0 %v23
  %v416 = vpop.f32.mrf.mxu0
  %v417 = vadd.f32 %v223, %v416
  %v418 = vpop.f32.mrf.mxu0
  %v419 = vadd.f32 %v227, %v418
  %420 = vmatprep.mubr.f32.mxu0 %v27
  %421 = vmatmul.mubr.f32.gmra.mxu0 %v26
  %v422 = vpop.f32.mrf.mxu0
  %v423 = vadd.f32 %v223, %v422
  %v424 = vpop.f32.mrf.mxu0
  %v425 = vadd.f32 %v227, %v424
  %426 = vmatprep.mubr.f32.mxu0 %v30
  %427 = vmatmul.mubr.f32.gmra.mxu0 %v29
  %v428 = vpop.f32.mrf.mxu0
  %v429 = vadd.f32 %v223, %v428
  %v430 = vpop.f32.mrf.mxu0
  %v431 = vadd.f32 %v227, %v430
  %432 = vmatprep.mubr.f32.mxu0 %v33
  %433 = vmatmul.mubr.f32.gmra.mxu0 %v32
  %v434 = vpop.f32.mrf.mxu0
  %v435 = vadd.f32 %v223, %v434
  %v436 = vpop.f32.mrf.mxu0
  %v437 = vadd.f32 %v227, %v436
  %438 = vmatprep.mubr.f32.mxu0 %v36
  %439 = vmatmul.mubr.f32.gmra.mxu0 %v35
  %v440 = vpop.f32.mrf.mxu0
  %v441 = vadd.f32 %v223, %v440
  %v442 = vpop.f32.mrf.mxu0
  %v443 = vadd.f32 %v227, %v442
  %444 = vmatprep.mubr.f32.mxu0 %v39
  %445 = vmatmul.mubr.f32.gmra.mxu0 %v38
  %v446 = vpop.f32.mrf.mxu0
  %v447 = vadd.f32 %v223, %v446
  %v448 = vpop.f32.mrf.mxu0
  %v449 = vadd.f32 %v227, %v448
  %450 = vmatprep.mubr.f32.mxu0 %v42
  %451 = vmatmul.mubr.f32.gmra.mxu0 %v41
  %v452 = vpop.f32.mrf.mxu0
  %v453 = vadd.f32 %v223, %v452
  %v454 = vpop.f32.mrf.mxu0
  %v455 = vadd.f32 %v227, %v454
  %456 = vmatprep.mubr.f32.mxu0 %v45
  %457 = vmatmul.mubr.f32.gmra.mxu0 %v44
  %v458 = vpop.f32.mrf.mxu0
  %v459 = vadd.f32 %v223, %v458
  %v460 = vpop.f32.mrf.mxu0
  %v461 = vadd.f32 %v227, %v460
  %462 = vmatprep.mubr.f32.mxu0 %v48
  %463 = vmatmul.mubr.f32.gmra.mxu0 %v47
  %v464 = vpop.f32.mrf.mxu0
  %v465 = vadd.f32 %v223, %v464
  %v466 = vpop.f32.mrf.mxu0
  %v467 = vadd.f32 %v227, %v466
  %468 = vmatprep.mubr.f32.mxu0 %v51
  %469 = vmatmul.mubr.f32.gmra.mxu0 %v50
  %v470 = vpop.f32.mrf.mxu0
  %v471 = vadd.f32 %v223, %v470
  %v472 = vpop.f32.mrf.mxu0
  %v473 = vadd.f32 %v227, %v472
  %474 = vmatprep.mubr.f32.mxu0 %v54
  %475 = vmatmul.mubr.f32.gmra.mxu0 %v53
  %v476 = vpop.f32.mrf.mxu0
  %v477 = vadd.f32 %v223, %v476
  %v478 = vpop.f32.mrf.mxu0
  %v479 = vadd.f32 %v227, %v478
  %480 = vmatprep.mubr.f32.mxu0 %v57
  %481 = vmatmul.mubr.f32.gmra.mxu0 %v56
  %v482 = vpop.f32.mrf.mxu0
  %v483 = vadd.f32 %v223, %v482
  %v484 = vpop.f32.mrf.mxu0
  %v485 = vadd.f32 %v227, %v484
  %486 = vmatprep.mubr.f32.mxu0 %v60
  %487 = vmatmul.mubr.f32.gmra.mxu0 %v59
  %v488 = vpop.f32.mrf.mxu0
  %v489 = vadd.f32 %v223, %v488
  %v490 = vpop.f32.mrf.mxu0
  %v491 = vadd.f32 %v227, %v490
  %492 = vmatprep.mubr.f32.mxu0 %v63
  %493 = vmatmul.mubr.f32.gmra.mxu0 %v62
  %v494 = vpop.f32.mrf.mxu0
  %v495 = vadd.f32 %v223, %v494
  %v496 = vpop.f32.mrf.mxu0
  %v497 = vadd.f32 %v227, %v496
  %498 = vmatprep.mubr.f32.mxu0 %v66
  %499 = vmatmul.mubr.f32.gmra.mxu0 %v65
  %v500 = vpop.f32.mrf.mxu0
  %v501 = vadd.f32 %v223, %v500
  %v502 = vpop.f32.mrf.mxu0
  %v503 = vadd.f32 %v227, %v502
  %504 = vmatprep.mubr.f32.mxu0 %v69
  %505 = vmatmul.mubr.f32.gmra.mxu0 %v68
  %v506 = vpop.f32.mrf.mxu0
  %v507 = vadd.f32 %v223, %v506
  %v508 = vpop.f32.mrf.mxu0
  %v509 = vadd.f32 %v227, %v508
  %510 = vmatprep.mubr.f32.mxu0 %v72
  %511 = vmatmul.mubr.f32.gmra.mxu0 %v71
  %v512 = vpop.f32.mrf.mxu0
  %v513 = vadd.f32 %v223, %v512
  %v514 = vpop.f32.mrf.mxu0
  %v515 = vadd.f32 %v227, %v514
  %516 = vmatprep.mubr.f32.mxu0 %v75
  %517 = vmatmul.mubr.f32.gmra.mxu0 %v74
  %v518 = vpop.f32.mrf.mxu0
  %v519 = vadd.f32 %v223, %v518
  %v520 = vpop.f32.mrf.mxu0
  %v521 = vadd.f32 %v227, %v520
  %522 = vmatprep.mubr.f32.mxu0 %v78
  %523 = vmatmul.mubr.f32.gmra.mxu0 %v77
  %v524 = vpop.f32.mrf.mxu0
  %v525 = vadd.f32 %v223, %v524
  %v526 = vpop.f32.mrf.mxu0
  %v527 = vadd.f32 %v227, %v526
  %528 = vmatprep.mubr.f32.mxu0 %v81
  %529 = vmatmul.mubr.f32.gmra.mxu0 %v80
  %v530 = vpop.f32.mrf.mxu0
  %v531 = vadd.f32 %v223, %v530
  %v532 = vpop.f32.mrf.mxu0
  %v533 = vadd.f32 %v227, %v532
  %534 = vmatprep.mubr.f32.mxu0 %v84
  %535 = vmatmul.mubr.f32.gmra.mxu0 %v83
  %v536 = vpop.f32.mrf.mxu0
  %v537 = vadd.f32 %v223, %v536
  %v538 = vpop.f32.mrf.mxu0
  %v539 = vadd.f32 %v227, %v538
  %540 = vmatprep.mubr.f32.mxu0 %v87
  %541 = vmatmul.mubr.f32.gmra.mxu0 %v86
  %v542 = vpop.f32.mrf.mxu0
  %v543 = vadd.f32 %v223, %v542
  %v544 = vpop.f32.mrf.mxu0
  %v545 = vadd.f32 %v227, %v544
  %546 = vmatprep.mubr.f32.mxu0 %v90
  %547 = vmatmul.mubr.f32.gmra.mxu0 %v89
  %v548 = vpop.f32.mrf.mxu0
  %v549 = vadd.f32 %v223, %v548
  %v550 = vpop.f32.mrf.mxu0
  %v551 = vadd.f32 %v227, %v550
  %552 = vmatprep.mubr.f32.mxu0 %v93
  %553 = vmatmul.mubr.f32.gmra.mxu0 %v92
  %v554 = vpop.f32.mrf.mxu0
  %v555 = vadd.f32 %v223, %v554
  %v556 = vpop.f32.mrf.mxu0
  %v557 = vadd.f32 %v227, %v556
  %558 = vmatprep.mubr.f32.mxu0 %v96
  %559 = vmatmul.mubr.f32.gmra.mxu0 %v95
  %v560 = vpop.f32.mrf.mxu0
  %v561 = vadd.f32 %v223, %v560
  %v562 = vpop.f32.mrf.mxu0
  %v563 = vadd.f32 %v227, %v562
  %564 = vmatprep.mubr.f32.mxu0 %v99
  %565 = vmatmul.mubr.f32.gmra.mxu0 %v98
  %v566 = vpop.f32.mrf.mxu0
  %v567 = vadd.f32 %v223, %v566
  %v568 = vpop.f32.mrf.mxu0
  %v569 = vadd.f32 %v227, %v568
  %570 = vmatprep.mubr.f32.mxu0 %v102
  %571 = vmatmul.mubr.f32.gmra.mxu0 %v101
  %v572 = vpop.f32.mrf.mxu0
  %v573 = vadd.f32 %v223, %v572
  %v574 = vpop.f32.mrf.mxu0
  %v575 = vadd.f32 %v227, %v574
  %576 = vmatprep.mubr.f32.mxu0 %v105
  %577 = vmatmul.mubr.f32.gmra.mxu0 %v104
  %v578 = vpop.f32.mrf.mxu0
  %v579 = vadd.f32 %v223, %v578
  %v580 = vpop.f32.mrf.mxu0
  %v581 = vadd.f32 %v227, %v580
  %582 = vmatprep.mubr.f32.mxu0 %v108
  %583 = vmatmul.mubr.f32.gmra.mxu0 %v107
  %v584 = vpop.f32.mrf.mxu0
  %v585 = vadd.f32 %v223, %v584
  %v586 = vpop.f32.mrf.mxu0
  %v587 = vadd.f32 %v227, %v586
  %588 = vdwg.mxu0
  %589 = vmatprep.subr.mxu0 0.0
  %590 = vmatpush1.msra.mxu0 0.0
  %591 = vmatprep.subr.mxu0 0.0
  %592 = vmatpush1.msra.mxu0 0.0
  %593 = vmatprep.subr.mxu0 0.0
  %594 = vmatpush1.msra.mxu0 0.0
  %595 = vmatprep.subr.mxu0 0.0
  %596 = vmatpush1.msra.mxu0 0.0
  %597 = vmatprep.subr.mxu0 0.0
  %598 = vmatpush1.msra.mxu0 0.0
  %599 = vmatprep.subr.mxu0 0.0
  %600 = vmatpush1.msra.mxu0 0.0
  %601 = vmatprep.subr.mxu0 0.0
  %602 = vmatpush1.msra.mxu0 0.0
  %603 = vmatprep.subr.mxu0 0.0
  %604 = vmatpush1.msra.mxu0 0.0
  %605 = vmatprep.subr.mxu0 0.0
  %606 = vmatpush1.msra.mxu0 0.0
  %607 = vmatprep.subr.mxu0 0.0
  %608 = vmatpush1.msra.mxu0 0.0
  %609 = vmatprep.subr.mxu0 0.0
  %610 = vmatpush1.msra.mxu0 0.0
  %611 = vmatprep.subr.mxu0 0.0
  %612 = vmatpush1.msra.mxu0 0.0
  %613 = vmatprep.subr.mxu0 %v216
  %614 = vmatpush1.msra.mxu0 %v215
  %615 = vmatprep.subr.mxu0 %v213
  %616 = vmatpush1.msra.mxu0 %v212
  %617 = vmatprep.subr.mxu0 %v210
  %618 = vmatpush1.msra.mxu0 %v209
  %619 = vmatprep.subr.mxu0 %v207
  %620 = vmatpush1.msra.mxu0 %v206
  %621 = vmatprep.subr.mxu0 0.0
  %622 = vmatpush2.msra.mxu0 0.0
  %623 = vmatprep.subr.mxu0 0.0
  %624 = vmatpush2.msra.mxu0 0.0
  %625 = vmatprep.subr.mxu0 0.0
  %626 = vmatpush2.msra.mxu0 0.0
  %627 = vmatprep.subr.mxu0 0.0
  %628 = vmatpush2.msra.mxu0 0.0
  %629 = vmatprep.subr.mxu0 0.0
  %630 = vmatpush2.msra.mxu0 0.0
  %631 = vmatprep.subr.mxu0 0.0
  %632 = vmatpush2.msra.mxu0 0.0
  %633 = vmatprep.subr.mxu0 0.0
  %634 = vmatpush2.msra.mxu0 0.0
  %635 = vmatprep.subr.mxu0 0.0
  %636 = vmatpush2.msra.mxu0 0.0
  %637 = vmatprep.subr.mxu0 0.0
  %638 = vmatpush2.msra.mxu0 0.0
  %639 = vmatprep.subr.mxu0 0.0
  %640 = vmatpush2.msra.mxu0 0.0
  %641 = vmatprep.subr.mxu0 0.0
  %642 = vmatpush2.msra.mxu0 0.0
  %643 = vmatprep.subr.mxu0 0.0
  %644 = vmatpush2.msra.mxu0 0.0
  %645 = vmatprep.subr.mxu0 0.0
  %646 = vmatpush2.msra.mxu0 0.0
  %647 = vmatprep.subr.mxu0 0.0
  %648 = vmatpush2.msra.mxu0 0.0
  %649 = vmatprep.subr.mxu0 0.0
  %650 = vmatpush2.msra.mxu0 0.0
  %651 = vmatprep.subr.mxu0 0.0
  %652 = vmatpush2.msra.mxu0 0.0
  %653 = vmatprep.mubr.f32.mxu0 0.0
  %654 = vmatmul.mubr.f32.gmra.mxu0 %v237
  %v655 = vpop.f32.mrf.mxu0
  %v656 = vadd.f32 %v399, %v655
  %v657 = vpop.f32.mrf.mxu0
  %v658 = vadd.f32 %v401, %v657
  %659 = vmatprep.mubr.f32.mxu0 0.0
  %660 = vmatmul.mubr.f32.gmra.mxu0 %v240
  %v661 = vpop.f32.mrf.mxu0
  %v662 = vadd.f32 %v405, %v661
  %v663 = vpop.f32.mrf.mxu0
  %v664 = vadd.f32 %v407, %v663
  %665 = vmatprep.mubr.f32.mxu0 0.0
  %666 = vmatmul.mubr.f32.gmra.mxu0 %v243
  %v667 = vpop.f32.mrf.mxu0
  %v668 = vadd.f32 %v411, %v667
  %v669 = vpop.f32.mrf.mxu0
  %v670 = vadd.f32 %v413, %v669
  %671 = vmatprep.mubr.f32.mxu0 0.0
  %672 = vmatmul.mubr.f32.gmra.mxu0 %v246
  %v673 = vpop.f32.mrf.mxu0
  %v674 = vadd.f32 %v417, %v673
  %v675 = vpop.f32.mrf.mxu0
  %v676 = vadd.f32 %v419, %v675
  %677 = vmatprep.mubr.f32.mxu0 0.0
  %678 = vmatmul.mubr.f32.gmra.mxu0 %v249
  %v679 = vpop.f32.mrf.mxu0
  %v680 = vadd.f32 %v423, %v679
  %v681 = vpop.f32.mrf.mxu0
  %v682 = vadd.f32 %v425, %v681
  %683 = vmatprep.mubr.f32.mxu0 0.0
  %684 = vmatmul.mubr.f32.gmra.mxu0 %v252
  %v685 = vpop.f32.mrf.mxu0
  %v686 = vadd.f32 %v429, %v685
  %v687 = vpop.f32.mrf.mxu0
  %v688 = vadd.f32 %v431, %v687
  %689 = vmatprep.mubr.f32.mxu0 0.0
  %690 = vmatmul.mubr.f32.gmra.mxu0 %v255
  %v691 = vpop.f32.mrf.mxu0
  %v692 = vadd.f32 %v435, %v691
  %v693 = vpop.f32.mrf.mxu0
  %v694 = vadd.f32 %v437, %v693
  %695 = vmatprep.mubr.f32.mxu0 0.0
  %696 = vmatmul.mubr.f32.gmra.mxu0 %v258
  %v697 = vpop.f32.mrf.mxu0
  %v698 = vadd.f32 %v441, %v697
  %v699 = vpop.f32.mrf.mxu0
  %v700 = vadd.f32 %v443, %v699
  %701 = vmatprep.mubr.f32.mxu0 0.0
  %702 = vmatmul.mubr.f32.gmra.mxu0 %v261
  %v703 = vpop.f32.mrf.mxu0
  %v704 = vadd.f32 %v447, %v703
  %v705 = vpop.f32.mrf.mxu0
  %v706 = vadd.f32 %v449, %v705
  %707 = vmatprep.mubr.f32.mxu0 0.0
  %708 = vmatmul.mubr.f32.gmra.mxu0 %v264
  %v709 = vpop.f32.mrf.mxu0
  %v710 = vadd.f32 %v453, %v709
  %v711 = vpop.f32.mrf.mxu0
  %v712 = vadd.f32 %v455, %v711
  %713 = vmatprep.mubr.f32.mxu0 0.0
  %714 = vmatmul.mubr.f32.gmra.mxu0 %v267
  %v715 = vpop.f32.mrf.mxu0
  %v716 = vadd.f32 %v459, %v715
  %v717 = vpop.f32.mrf.mxu0
  %v718 = vadd.f32 %v461, %v717
  %719 = vmatprep.mubr.f32.mxu0 0.0
  %720 = vmatmul.mubr.f32.gmra.mxu0 %v270
  %v721 = vpop.f32.mrf.mxu0
  %v722 = vadd.f32 %v465, %v721
  %v723 = vpop.f32.mrf.mxu0
  %v724 = vadd.f32 %v467, %v723
  %725 = vmatprep.mubr.f32.mxu0 0.0
  %726 = vmatmul.mubr.f32.gmra.mxu0 %v273
  %v727 = vpop.f32.mrf.mxu0
  %v728 = vadd.f32 %v471, %v727
  %v729 = vpop.f32.mrf.mxu0
  %v730 = vadd.f32 %v473, %v729
  %731 = vmatprep.mubr.f32.mxu0 0.0
  %732 = vmatmul.mubr.f32.gmra.mxu0 %v276
  %v733 = vpop.f32.mrf.mxu0
  %v734 = vadd.f32 %v477, %v733
  %v735 = vpop.f32.mrf.mxu0
  %v736 = vadd.f32 %v479, %v735
  %737 = vmatprep.mubr.f32.mxu0 0.0
  %738 = vmatmul.mubr.f32.gmra.mxu0 %v279
  %v739 = vpop.f32.mrf.mxu0
  %v740 = vadd.f32 %v483, %v739
  %v741 = vpop.f32.mrf.mxu0
  %v742 = vadd.f32 %v485, %v741
  %743 = vmatprep.mubr.f32.mxu0 0.0
  %744 = vmatmul.mubr.f32.gmra.mxu0 %v282
  %v745 = vpop.f32.mrf.mxu0
  %v746 = vadd.f32 %v489, %v745
  %v747 = vpop.f32.mrf.mxu0
  %v748 = vadd.f32 %v491, %v747
  %749 = vmatprep.mubr.f32.mxu0 0.0
  %750 = vmatmul.mubr.f32.gmra.mxu0 %v285
  %v751 = vpop.f32.mrf.mxu0
  %v752 = vadd.f32 %v495, %v751
  %v753 = vpop.f32.mrf.mxu0
  %v754 = vadd.f32 %v497, %v753
  %755 = vmatprep.mubr.f32.mxu0 0.0
  %756 = vmatmul.mubr.f32.gmra.mxu0 %v288
  %v757 = vpop.f32.mrf.mxu0
  %v758 = vadd.f32 %v501, %v757
  %v759 = vpop.f32.mrf.mxu0
  %v760 = vadd.f32 %v503, %v759
  %761 = vmatprep.mubr.f32.mxu0 0.0
  %762 = vmatmul.mubr.f32.gmra.mxu0 %v291
  %v763 = vpop.f32.mrf.mxu0
  %v764 = vadd.f32 %v507, %v763
  %v765 = vpop.f32.mrf.mxu0
  %v766 = vadd.f32 %v509, %v765
  %767 = vmatprep.mubr.f32.mxu0 0.0
  %768 = vmatmul.mubr.f32.gmra.mxu0 %v294
  %v769 = vpop.f32.mrf.mxu0
  %v770 = vadd.f32 %v513, %v769
  %v771 = vpop.f32.mrf.mxu0
  %v772 = vadd.f32 %v515, %v771
  %773 = vmatprep.mubr.f32.mxu0 0.0
  %774 = vmatmul.mubr.f32.gmra.mxu0 %v297
  %v775 = vpop.f32.mrf.mxu0
  %v776 = vadd.f32 %v519, %v775
  %v777 = vpop.f32.mrf.mxu0
  %v778 = vadd.f32 %v521, %v777
  %779 = vmatprep.mubr.f32.mxu0 0.0
  %780 = vmatmul.mubr.f32.gmra.mxu0 %v300
  %v781 = vpop.f32.mrf.mxu0
  %v782 = vadd.f32 %v525, %v781
  %v783 = vpop.f32.mrf.mxu0
  %v784 = vadd.f32 %v527, %v783
  %785 = vmatprep.mubr.f32.mxu0 0.0
  %786 = vmatmul.mubr.f32.gmra.mxu0 %v303
  %v787 = vpop.f32.mrf.mxu0
  %v788 = vadd.f32 %v531, %v787
  %v789 = vpop.f32.mrf.mxu0
  %v790 = vadd.f32 %v533, %v789
  %791 = vmatprep.mubr.f32.mxu0 0.0
  %792 = vmatmul.mubr.f32.gmra.mxu0 %v306
  %v793 = vpop.f32.mrf.mxu0
  %v794 = vadd.f32 %v537, %v793
  %v795 = vpop.f32.mrf.mxu0
  %v796 = vadd.f32 %v539, %v795
  %797 = vmatprep.mubr.f32.mxu0 0.0
  %798 = vmatmul.mubr.f32.gmra.mxu0 %v309
  %v799 = vpop.f32.mrf.mxu0
  %v800 = vadd.f32 %v543, %v799
  %v801 = vpop.f32.mrf.mxu0
  %v802 = vadd.f32 %v545, %v801
  %803 = vmatprep.mubr.f32.mxu0 0.0
  %804 = vmatmul.mubr.f32.gmra.mxu0 %v312
  %v805 = vpop.f32.mrf.mxu0
  %v806 = vadd.f32 %v549, %v805
  %v807 = vpop.f32.mrf.mxu0
  %v808 = vadd.f32 %v551, %v807
  %809 = vmatprep.mubr.f32.mxu0 0.0
  %810 = vmatmul.mubr.f32.gmra.mxu0 %v315
  %v811 = vpop.f32.mrf.mxu0
  %v812 = vadd.f32 %v555, %v811
  %v813 = vpop.f32.mrf.mxu0
  %v814 = vadd.f32 %v557, %v813
  %815 = vmatprep.mubr.f32.mxu0 0.0
  %816 = vmatmul.mubr.f32.gmra.mxu0 %v318
  %v817 = vpop.f32.mrf.mxu0
  %v818 = vadd.f32 %v561, %v817
  %v819 = vpop.f32.mrf.mxu0
  %v820 = vadd.f32 %v563, %v819
  %821 = vmatprep.mubr.f32.mxu0 0.0
  %822 = vmatmul.mubr.f32.gmra.mxu0 %v321
  %v823 = vpop.f32.mrf.mxu0
  %v824 = vadd.f32 %v567, %v823
  %v825 = vpop.f32.mrf.mxu0
  %v826 = vadd.f32 %v569, %v825
  %827 = vmatprep.mubr.f32.mxu0 0.0
  %828 = vmatmul.mubr.f32.gmra.mxu0 %v324
  %v829 = vpop.f32.mrf.mxu0
  %v830 = vadd.f32 %v573, %v829
  %v831 = vpop.f32.mrf.mxu0
  %v832 = vadd.f32 %v575, %v831
  %833 = vmatprep.mubr.f32.mxu0 0.0
  %834 = vmatmul.mubr.f32.gmra.mxu0 %v327
  %v835 = vpop.f32.mrf.mxu0
  %v836 = vadd.f32 %v579, %v835
  %v837 = vpop.f32.mrf.mxu0
  %v838 = vadd.f32 %v581, %v837
  %839 = vmatprep.mubr.f32.mxu0 0.0
  %840 = vmatmul.mubr.f32.gmra.mxu0 %v330
  %v841 = vpop.f32.mrf.mxu0
  %v842 = vadd.f32 %v585, %v841
  %v843 = vpop.f32.mrf.mxu0
  %v844 = vadd.f32 %v587, %v843
  %845 = vdwg.mxu0
  %846 = vmatprep.subr.mxu0 0.0
  %847 = vmatpush1.msra.mxu0 %v157
  %848 = vmatprep.subr.mxu0 0.0
  %849 = vmatpush1.msra.mxu0 %v154
  %850 = vmatprep.subr.mxu0 0.0
  %851 = vmatpush1.msra.mxu0 %v151
  %852 = vmatprep.subr.mxu0 0.0
  %853 = vmatpush1.msra.mxu0 %v148
  %854 = vmatprep.subr.mxu0 0.0
  %855 = vmatpush1.msra.mxu0 %v145
  %856 = vmatprep.subr.mxu0 0.0
  %857 = vmatpush1.msra.mxu0 %v142
  %858 = vmatprep.subr.mxu0 0.0
  %859 = vmatpush1.msra.mxu0 %v139
  %860 = vmatprep.subr.mxu0 0.0
  %861 = vmatpush1.msra.mxu0 %v136
  %862 = vmatprep.subr.mxu0 0.0
  %863 = vmatpush1.msra.mxu0 %v133
  %864 = vmatprep.subr.mxu0 0.0
  %865 = vmatpush1.msra.mxu0 %v130
  %866 = vmatprep.subr.mxu0 0.0
  %867 = vmatpush1.msra.mxu0 %v127
  %868 = vmatprep.subr.mxu0 0.0
  %869 = vmatpush1.msra.mxu0 %v124
  %870 = vmatprep.subr.mxu0 0.0
  %871 = vmatpush1.msra.mxu0 %v121
  %872 = vmatprep.subr.mxu0 0.0
  %873 = vmatpush1.msra.mxu0 %v118
  %874 = vmatprep.subr.mxu0 0.0
  %875 = vmatpush1.msra.mxu0 %v115
  %876 = vmatprep.subr.mxu0 0.0
  %877 = vmatpush1.msra.mxu0 %v112
  %878 = vmatprep.subr.mxu0 0.0
  %879 = vmatpush2.msra.mxu0 %v205
  %880 = vmatprep.subr.mxu0 0.0
  %881 = vmatpush2.msra.mxu0 %v202
  %882 = vmatprep.subr.mxu0 0.0
  %883 = vmatpush2.msra.mxu0 %v199
  %884 = vmatprep.subr.mxu0 0.0
  %885 = vmatpush2.msra.mxu0 %v196
  %886 = vmatprep.subr.mxu0 0.0
  %887 = vmatpush2.msra.mxu0 %v193
  %888 = vmatprep.subr.mxu0 0.0
  %889 = vmatpush2.msra.mxu0 %v190
  %890 = vmatprep.subr.mxu0 0.0
  %891 = vmatpush2.msra.mxu0 %v187
  %892 = vmatprep.subr.mxu0 0.0
  %893 = vmatpush2.msra.mxu0 %v184
  %894 = vmatprep.subr.mxu0 0.0
  %895 = vmatpush2.msra.mxu0 %v181
  %896 = vmatprep.subr.mxu0 0.0
  %897 = vmatpush2.msra.mxu0 %v178
  %898 = vmatprep.subr.mxu0 0.0
  %899 = vmatpush2.msra.mxu0 %v175
  %900 = vmatprep.subr.mxu0 0.0
  %901 = vmatpush2.msra.mxu0 %v172
  %902 = vmatprep.subr.mxu0 0.0
  %903 = vmatpush2.msra.mxu0 %v169
  %904 = vmatprep.subr.mxu0 0.0
  %905 = vmatpush2.msra.mxu0 %v166
  %906 = vmatprep.subr.mxu0 0.0
  %907 = vmatpush2.msra.mxu0 %v163
  %908 = vmatprep.subr.mxu0 0.0
  %909 = vmatpush2.msra.mxu0 %v160
  %910 = vmatprep.mubr.f32.mxu0 %v15
  %911 = vmatmul.mubr.f32.gmra.mxu0 %v14
  %v912 = vpop.f32.mrf.mxu0
  %v913 = vadd.f32 %v231, %v912
  %v914 = vpop.f32.mrf.mxu0
  %915 = vmatprep.mubr.f32.mxu0 %v18
  %916 = vmatmul.mubr.f32.gmra.mxu0 %v17
  %v917 = vpop.f32.mrf.mxu0
  %v918 = vadd.f32 %v231, %v917
  %v919 = vpop.f32.mrf.mxu0
  %920 = vmatprep.mubr.f32.mxu0 %v21
  %921 = vmatmul.mubr.f32.gmra.mxu0 %v20
  %v922 = vpop.f32.mrf.mxu0
  %v923 = vadd.f32 %v231, %v922
  %v924 = vpop.f32.mrf.mxu0
  %925 = vmatprep.mubr.f32.mxu0 %v24
  %926 = vmatmul.mubr.f32.gmra.mxu0 %v23
  %v927 = vpop.f32.mrf.mxu0
  %v928 = vadd.f32 %v231, %v927
  %v929 = vpop.f32.mrf.mxu0
  %930 = vmatprep.mubr.f32.mxu0 %v27
  %931 = vmatmul.mubr.f32.gmra.mxu0 %v26
  %v932 = vpop.f32.mrf.mxu0
  %v933 = vadd.f32 %v231, %v932
  %v934 = vpop.f32.mrf.mxu0
  %935 = vmatprep.mubr.f32.mxu0 %v30
  %936 = vmatmul.mubr.f32.gmra.mxu0 %v29
  %v937 = vpop.f32.mrf.mxu0
  %v938 = vadd.f32 %v231, %v937
  %v939 = vpop.f32.mrf.mxu0
  %940 = vmatprep.mubr.f32.mxu0 %v33
  %941 = vmatmul.mubr.f32.gmra.mxu0 %v32
  %v942 = vpop.f32.mrf.mxu0
  %v943 = vadd.f32 %v231, %v942
  %v944 = vpop.f32.mrf.mxu0
  %945 = vmatprep.mubr.f32.mxu0 %v36
  %946 = vmatmul.mubr.f32.gmra.mxu0 %v35
  %v947 = vpop.f32.mrf.mxu0
  %v948 = vadd.f32 %v231, %v947
  %v949 = vpop.f32.mrf.mxu0
  %950 = vmatprep.mubr.f32.mxu0 %v39
  %951 = vmatmul.mubr.f32.gmra.mxu0 %v38
  %v952 = vpop.f32.mrf.mxu0
  %v953 = vadd.f32 %v231, %v952
  %v954 = vpop.f32.mrf.mxu0
  %955 = vmatprep.mubr.f32.mxu0 %v42
  %956 = vmatmul.mubr.f32.gmra.mxu0 %v41
  %v957 = vpop.f32.mrf.mxu0
  %v958 = vadd.f32 %v231, %v957
  %v959 = vpop.f32.mrf.mxu0
  %960 = vmatprep.mubr.f32.mxu0 %v45
  %961 = vmatmul.mubr.f32.gmra.mxu0 %v44
  %v962 = vpop.f32.mrf.mxu0
  %v963 = vadd.f32 %v231, %v962
  %v964 = vpop.f32.mrf.mxu0
  %965 = vmatprep.mubr.f32.mxu0 %v48
  %966 = vmatmul.mubr.f32.gmra.mxu0 %v47
  %v967 = vpop.f32.mrf.mxu0
  %v968 = vadd.f32 %v231, %v967
  %v969 = vpop.f32.mrf.mxu0
  %970 = vmatprep.mubr.f32.mxu0 %v51
  %971 = vmatmul.mubr.f32.gmra.mxu0 %v50
  %v972 = vpop.f32.mrf.mxu0
  %v973 = vadd.f32 %v231, %v972
  %v974 = vpop.f32.mrf.mxu0
  %975 = vmatprep.mubr.f32.mxu0 %v54
  %976 = vmatmul.mubr.f32.gmra.mxu0 %v53
  %v977 = vpop.f32.mrf.mxu0
  %v978 = vadd.f32 %v231, %v977
  %v979 = vpop.f32.mrf.mxu0
  %980 = vmatprep.mubr.f32.mxu0 %v57
  %981 = vmatmul.mubr.f32.gmra.mxu0 %v56
  %v982 = vpop.f32.mrf.mxu0
  %v983 = vadd.f32 %v231, %v982
  %v984 = vpop.f32.mrf.mxu0
  %985 = vmatprep.mubr.f32.mxu0 %v60
  %986 = vmatmul.mubr.f32.gmra.mxu0 %v59
  %v987 = vpop.f32.mrf.mxu0
  %v988 = vadd.f32 %v231, %v987
  %v989 = vpop.f32.mrf.mxu0
  %990 = vmatprep.mubr.f32.mxu0 %v63
  %991 = vmatmul.mubr.f32.gmra.mxu0 %v62
  %v992 = vpop.f32.mrf.mxu0
  %v993 = vadd.f32 %v231, %v992
  %v994 = vpop.f32.mrf.mxu0
  %995 = vmatprep.mubr.f32.mxu0 %v66
  %996 = vmatmul.mubr.f32.gmra.mxu0 %v65
  %v997 = vpop.f32.mrf.mxu0
  %v998 = vadd.f32 %v231, %v997
  %v999 = vpop.f32.mrf.mxu0
  %1000 = vmatprep.mubr.f32.mxu0 %v69
  %1001 = vmatmul.mubr.f32.gmra.mxu0 %v68
  %v1002 = vpop.f32.mrf.mxu0
  %v1003 = vadd.f32 %v231, %v1002
  %v1004 = vpop.f32.mrf.mxu0
  %1005 = vmatprep.mubr.f32.mxu0 %v72
  %1006 = vmatmul.mubr.f32.gmra.mxu0 %v71
  %v1007 = vpop.f32.mrf.mxu0
  %v1008 = vadd.f32 %v231, %v1007
  %v1009 = vpop.f32.mrf.mxu0
  %1010 = vmatprep.mubr.f32.mxu0 %v75
  %1011 = vmatmul.mubr.f32.gmra.mxu0 %v74
  %v1012 = vpop.f32.mrf.mxu0
  %v1013 = vadd.f32 %v231, %v1012
  %v1014 = vpop.f32.mrf.mxu0
  %1015 = vmatprep.mubr.f32.mxu0 %v78
  %1016 = vmatmul.mubr.f32.gmra.mxu0 %v77
  %v1017 = vpop.f32.mrf.mxu0
  %v1018 = vadd.f32 %v231, %v1017
  %v1019 = vpop.f32.mrf.mxu0
  %1020 = vmatprep.mubr.f32.mxu0 %v81
  %1021 = vmatmul.mubr.f32.gmra.mxu0 %v80
  %v1022 = vpop.f32.mrf.mxu0
  %v1023 = vadd.f32 %v231, %v1022
  %v1024 = vpop.f32.mrf.mxu0
  %1025 = vmatprep.mubr.f32.mxu0 %v84
  %1026 = vmatmul.mubr.f32.gmra.mxu0 %v83
  %v1027 = vpop.f32.mrf.mxu0
  %v1028 = vadd.f32 %v231, %v1027
  %v1029 = vpop.f32.mrf.mxu0
  %1030 = vmatprep.mubr.f32.mxu0 %v87
  %1031 = vmatmul.mubr.f32.gmra.mxu0 %v86
  %v1032 = vpop.f32.mrf.mxu0
  %v1033 = vadd.f32 %v231, %v1032
  %v1034 = vpop.f32.mrf.mxu0
  %1035 = vmatprep.mubr.f32.mxu0 %v90
  %1036 = vmatmul.mubr.f32.gmra.mxu0 %v89
  %v1037 = vpop.f32.mrf.mxu0
  %v1038 = vadd.f32 %v231, %v1037
  %v1039 = vpop.f32.mrf.mxu0
  %1040 = vmatprep.mubr.f32.mxu0 %v93
  %1041 = vmatmul.mubr.f32.gmra.mxu0 %v92
  %v1042 = vpop.f32.mrf.mxu0
  %v1043 = vadd.f32 %v231, %v1042
  %v1044 = vpop.f32.mrf.mxu0
  %1045 = vmatprep.mubr.f32.mxu0 %v96
  %1046 = vmatmul.mubr.f32.gmra.mxu0 %v95
  %v1047 = vpop.f32.mrf.mxu0
  %v1048 = vadd.f32 %v231, %v1047
  %v1049 = vpop.f32.mrf.mxu0
  %1050 = vmatprep.mubr.f32.mxu0 %v99
  %1051 = vmatmul.mubr.f32.gmra.mxu0 %v98
  %v1052 = vpop.f32.mrf.mxu0
  %v1053 = vadd.f32 %v231, %v1052
  %v1054 = vpop.f32.mrf.mxu0
  %1055 = vmatprep.mubr.f32.mxu0 %v102
  %1056 = vmatmul.mubr.f32.gmra.mxu0 %v101
  %v1057 = vpop.f32.mrf.mxu0
  %v1058 = vadd.f32 %v231, %v1057
  %v1059 = vpop.f32.mrf.mxu0
  %1060 = vmatprep.mubr.f32.mxu0 %v105
  %1061 = vmatmul.mubr.f32.gmra.mxu0 %v104
  %v1062 = vpop.f32.mrf.mxu0
  %v1063 = vadd.f32 %v231, %v1062
  %v1064 = vpop.f32.mrf.mxu0
  %1065 = vmatprep.mubr.f32.mxu0 %v108
  %1066 = vmatmul.mubr.f32.gmra.mxu0 %v107
  %v1067 = vpop.f32.mrf.mxu0
  %v1068 = vadd.f32 %v231, %v1067
  %v1069 = vpop.f32.mrf.mxu0
  %1070 = vdwg.mxu0
  %1071 = vmatprep.subr.mxu0 0.0
  %1072 = vmatpush1.msra.mxu0 0.0
  %1073 = vmatprep.subr.mxu0 0.0
  %1074 = vmatpush1.msra.mxu0 0.0
  %1075 = vmatprep.subr.mxu0 0.0
  %1076 = vmatpush1.msra.mxu0 0.0
  %1077 = vmatprep.subr.mxu0 0.0
  %1078 = vmatpush1.msra.mxu0 0.0
  %1079 = vmatprep.subr.mxu0 0.0
  %1080 = vmatpush1.msra.mxu0 0.0
  %1081 = vmatprep.subr.mxu0 0.0
  %1082 = vmatpush1.msra.mxu0 0.0
  %1083 = vmatprep.subr.mxu0 0.0
  %1084 = vmatpush1.msra.mxu0 0.0
  %1085 = vmatprep.subr.mxu0 0.0
  %1086 = vmatpush1.msra.mxu0 0.0
  %1087 = vmatprep.subr.mxu0 0.0
  %1088 = vmatpush1.msra.mxu0 0.0
  %1089 = vmatprep.subr.mxu0 0.0
  %1090 = vmatpush1.msra.mxu0 0.0
  %1091 = vmatprep.subr.mxu0 0.0
  %1092 = vmatpush1.msra.mxu0 0.0
  %1093 = vmatprep.subr.mxu0 0.0
  %1094 = vmatpush1.msra.mxu0 0.0
  %1095 = vmatprep.subr.mxu0 0.0
  %1096 = vmatpush1.msra.mxu0 %v217
  %1097 = vmatprep.subr.mxu0 0.0
  %1098 = vmatpush1.msra.mxu0 %v214
  %1099 = vmatprep.subr.mxu0 0.0
  %1100 = vmatpush1.msra.mxu0 %v211
  %1101 = vmatprep.subr.mxu0 0.0
  %1102 = vmatpush1.msra.mxu0 %v208
  %1103 = vmatprep.subr.mxu0 0.0
  %1104 = vmatpush2.msra.mxu0 0.0
  %1105 = vmatprep.subr.mxu0 0.0
  %1106 = vmatpush2.msra.mxu0 0.0
  %1107 = vmatprep.subr.mxu0 0.0
  %1108 = vmatpush2.msra.mxu0 0.0
  %1109 = vmatprep.subr.mxu0 0.0
  %1110 = vmatpush2.msra.mxu0 0.0
  %1111 = vmatprep.subr.mxu0 0.0
  %1112 = vmatpush2.msra.mxu0 0.0
  %1113 = vmatprep.subr.mxu0 0.0
  %1114 = vmatpush2.msra.mxu0 0.0
  %1115 = vmatprep.subr.mxu0 0.0
  %1116 = vmatpush2.msra.mxu0 0.0
  %1117 = vmatprep.subr.mxu0 0.0
  %1118 = vmatpush2.msra.mxu0 0.0
  %1119 = vmatprep.subr.mxu0 0.0
  %1120 = vmatpush2.msra.mxu0 0.0
  %1121 = vmatprep.subr.mxu0 0.0
  %1122 = vmatpush2.msra.mxu0 0.0
  %1123 = vmatprep.subr.mxu0 0.0
  %1124 = vmatpush2.msra.mxu0 0.0
  %1125 = vmatprep.subr.mxu0 0.0
  %1126 = vmatpush2.msra.mxu0 0.0
  %1127 = vmatprep.subr.mxu0 0.0
  %1128 = vmatpush2.msra.mxu0 0.0
  %1129 = vmatprep.subr.mxu0 0.0
  %1130 = vmatpush2.msra.mxu0 0.0
  %1131 = vmatprep.subr.mxu0 0.0
  %1132 = vmatpush2.msra.mxu0 0.0
  %1133 = vmatprep.subr.mxu0 0.0
  %1134 = vmatpush2.msra.mxu0 0.0
  %1135 = vmatprep.mubr.f32.mxu0 0.0
  %1136 = vmatmul.mubr.f32.gmra.mxu0 %v237
  %v1137 = vpop.f32.mrf.mxu0
  %v1138 = vadd.f32 %v913, %v1137
  %v1139 = vpop.f32.mrf.mxu0
  %1140 = vmatprep.mubr.f32.mxu0 0.0
  %1141 = vmatmul.mubr.f32.gmra.mxu0 %v240
  %v1142 = vpop.f32.mrf.mxu0
  %v1143 = vadd.f32 %v918, %v1142
  %v1144 = vpop.f32.mrf.mxu0
  %1145 = vmatprep.mubr.f32.mxu0 0.0
  %1146 = vmatmul.mubr.f32.gmra.mxu0 %v243
  %v1147 = vpop.f32.mrf.mxu0
  %v1148 = vadd.f32 %v923, %v1147
  %v1149 = vpop.f32.mrf.mxu0
  %1150 = vmatprep.mubr.f32.mxu0 0.0
  %1151 = vmatmul.mubr.f32.gmra.mxu0 %v246
  %v1152 = vpop.f32.mrf.mxu0
  %v1153 = vadd.f32 %v928, %v1152
  %v1154 = vpop.f32.mrf.mxu0
  %1155 = vmatprep.mubr.f32.mxu0 0.0
  %1156 = vmatmul.mubr.f32.gmra.mxu0 %v249
  %v1157 = vpop.f32.mrf.mxu0
  %v1158 = vadd.f32 %v933, %v1157
  %v1159 = vpop.f32.mrf.mxu0
  %1160 = vmatprep.mubr.f32.mxu0 0.0
  %1161 = vmatmul.mubr.f32.gmra.mxu0 %v252
  %v1162 = vpop.f32.mrf.mxu0
  %v1163 = vadd.f32 %v938, %v1162
  %v1164 = vpop.f32.mrf.mxu0
  %1165 = vmatprep.mubr.f32.mxu0 0.0
  %1166 = vmatmul.mubr.f32.gmra.mxu0 %v255
  %v1167 = vpop.f32.mrf.mxu0
  %v1168 = vadd.f32 %v943, %v1167
  %v1169 = vpop.f32.mrf.mxu0
  %1170 = vmatprep.mubr.f32.mxu0 0.0
  %1171 = vmatmul.mubr.f32.gmra.mxu0 %v258
  %v1172 = vpop.f32.mrf.mxu0
  %v1173 = vadd.f32 %v948, %v1172
  %v1174 = vpop.f32.mrf.mxu0
  %1175 = vmatprep.mubr.f32.mxu0 0.0
  %1176 = vmatmul.mubr.f32.gmra.mxu0 %v261
  %v1177 = vpop.f32.mrf.mxu0
  %v1178 = vadd.f32 %v953, %v1177
  %v1179 = vpop.f32.mrf.mxu0
  %1180 = vmatprep.mubr.f32.mxu0 0.0
  %1181 = vmatmul.mubr.f32.gmra.mxu0 %v264
  %v1182 = vpop.f32.mrf.mxu0
  %v1183 = vadd.f32 %v958, %v1182
  %v1184 = vpop.f32.mrf.mxu0
  %1185 = vmatprep.mubr.f32.mxu0 0.0
  %1186 = vmatmul.mubr.f32.gmra.mxu0 %v267
  %v1187 = vpop.f32.mrf.mxu0
  %v1188 = vadd.f32 %v963, %v1187
  %v1189 = vpop.f32.mrf.mxu0
  %1190 = vmatprep.mubr.f32.mxu0 0.0
  %1191 = vmatmul.mubr.f32.gmra.mxu0 %v270
  %v1192 = vpop.f32.mrf.mxu0
  %v1193 = vadd.f32 %v968, %v1192
  %v1194 = vpop.f32.mrf.mxu0
  %1195 = vmatprep.mubr.f32.mxu0 0.0
  %1196 = vmatmul.mubr.f32.gmra.mxu0 %v273
  %v1197 = vpop.f32.mrf.mxu0
  %v1198 = vadd.f32 %v973, %v1197
  %v1199 = vpop.f32.mrf.mxu0
  %1200 = vmatprep.mubr.f32.mxu0 0.0
  %1201 = vmatmul.mubr.f32.gmra.mxu0 %v276
  %v1202 = vpop.f32.mrf.mxu0
  %v1203 = vadd.f32 %v978, %v1202
  %v1204 = vpop.f32.mrf.mxu0
  %1205 = vmatprep.mubr.f32.mxu0 0.0
  %1206 = vmatmul.mubr.f32.gmra.mxu0 %v279
  %v1207 = vpop.f32.mrf.mxu0
  %v1208 = vadd.f32 %v983, %v1207
  %v1209 = vpop.f32.mrf.mxu0
  %1210 = vmatprep.mubr.f32.mxu0 0.0
  %1211 = vmatmul.mubr.f32.gmra.mxu0 %v282
  %v1212 = vpop.f32.mrf.mxu0
  %v1213 = vadd.f32 %v988, %v1212
  %v1214 = vpop.f32.mrf.mxu0
  %1215 = vmatprep.mubr.f32.mxu0 0.0
  %1216 = vmatmul.mubr.f32.gmra.mxu0 %v285
  %v1217 = vpop.f32.mrf.mxu0
  %v1218 = vadd.f32 %v993, %v1217
  %v1219 = vpop.f32.mrf.mxu0
  %1220 = vmatprep.mubr.f32.mxu0 0.0
  %1221 = vmatmul.mubr.f32.gmra.mxu0 %v288
  %v1222 = vpop.f32.mrf.mxu0
  %v1223 = vadd.f32 %v998, %v1222
  %v1224 = vpop.f32.mrf.mxu0
  %1225 = vmatprep.mubr.f32.mxu0 0.0
  %1226 = vmatmul.mubr.f32.gmra.mxu0 %v291
  %v1227 = vpop.f32.mrf.mxu0
  %v1228 = vadd.f32 %v1003, %v1227
  %v1229 = vpop.f32.mrf.mxu0
  %1230 = vmatprep.mubr.f32.mxu0 0.0
  %1231 = vmatmul.mubr.f32.gmra.mxu0 %v294
  %v1232 = vpop.f32.mrf.mxu0
  %v1233 = vadd.f32 %v1008, %v1232
  %v1234 = vpop.f32.mrf.mxu0
  %1235 = vmatprep.mubr.f32.mxu0 0.0
  %1236 = vmatmul.mubr.f32.gmra.mxu0 %v297
  %v1237 = vpop.f32.mrf.mxu0
  %v1238 = vadd.f32 %v1013, %v1237
  %v1239 = vpop.f32.mrf.mxu0
  %1240 = vmatprep.mubr.f32.mxu0 0.0
  %1241 = vmatmul.mubr.f32.gmra.mxu0 %v300
  %v1242 = vpop.f32.mrf.mxu0
  %v1243 = vadd.f32 %v1018, %v1242
  %v1244 = vpop.f32.mrf.mxu0
  %1245 = vmatprep.mubr.f32.mxu0 0.0
  %1246 = vmatmul.mubr.f32.gmra.mxu0 %v303
  %v1247 = vpop.f32.mrf.mxu0
  %v1248 = vadd.f32 %v1023, %v1247
  %v1249 = vpop.f32.mrf.mxu0
  %1250 = vmatprep.mubr.f32.mxu0 0.0
  %1251 = vmatmul.mubr.f32.gmra.mxu0 %v306
  %v1252 = vpop.f32.mrf.mxu0
  %v1253 = vadd.f32 %v1028, %v1252
  %v1254 = vpop.f32.mrf.mxu0
  %1255 = vmatprep.mubr.f32.mxu0 0.0
  %1256 = vmatmul.mubr.f32.gmra.mxu0 %v309
  %v1257 = vpop.f32.mrf.mxu0
  %v1258 = vadd.f32 %v1033, %v1257
  %v1259 = vpop.f32.mrf.mxu0
  %1260 = vmatprep.mubr.f32.mxu0 0.0
  %1261 = vmatmul.mubr.f32.gmra.mxu0 %v312
  %v1262 = vpop.f32.mrf.mxu0
  %v1263 = vadd.f32 %v1038, %v1262
  %v1264 = vpop.f32.mrf.mxu0
  %1265 = vmatprep.mubr.f32.mxu0 0.0
  %1266 = vmatmul.mubr.f32.gmra.mxu0 %v315
  %v1267 = vpop.f32.mrf.mxu0
  %v1268 = vadd.f32 %v1043, %v1267
  %v1269 = vpop.f32.mrf.mxu0
  %1270 = vmatprep.mubr.f32.mxu0 0.0
  %1271 = vmatmul.mubr.f32.gmra.mxu0 %v318
  %v1272 = vpop.f32.mrf.mxu0
  %v1273 = vadd.f32 %v1048, %v1272
  %v1274 = vpop.f32.mrf.mxu0
  %1275 = vmatprep.mubr.f32.mxu0 0.0
  %1276 = vmatmul.mubr.f32.gmra.mxu0 %v321
  %v1277 = vpop.f32.mrf.mxu0
  %v1278 = vadd.f32 %v1053, %v1277
  %v1279 = vpop.f32.mrf.mxu0
  %1280 = vmatprep.mubr.f32.mxu0 0.0
  %1281 = vmatmul.mubr.f32.gmra.mxu0 %v324
  %v1282 = vpop.f32.mrf.mxu0
  %v1283 = vadd.f32 %v1058, %v1282
  %v1284 = vpop.f32.mrf.mxu0
  %1285 = vmatprep.mubr.f32.mxu0 0.0
  %1286 = vmatmul.mubr.f32.gmra.mxu0 %v327
  %v1287 = vpop.f32.mrf.mxu0
  %v1288 = vadd.f32 %v1063, %v1287
  %v1289 = vpop.f32.mrf.mxu0
  %1290 = vmatprep.mubr.f32.mxu0 0.0
  %1291 = vmatmul.mubr.f32.gmra.mxu0 %v330
  %v1292 = vpop.f32.mrf.mxu0
  %v1293 = vadd.f32 %v1068, %v1292
  %v1294 = vpop.f32.mrf.mxu0
  %1295 = vdwg.mxu0
  %1296 = vst [vmem:[%s3] sm:$0xff] %v656
  %1297 = vst [vmem:[%s3 + $0x8] sm:$0xff] %v658
  %vm1298 = vcmask 523264
  %1299 = vst.msk [vmem:[%s3 + $0x10] sm:$0xff] %vm1298, %v1138
  %1300 = vst [vmem:[%s3 + $0x18] sm:$0xff] %v662
  %1301 = vst [vmem:[%s3 + $0x20] sm:$0xff] %v664
  %1302 = vst.msk [vmem:[%s3 + $0x28] sm:$0xff] %vm1298, %v1143
  %1303 = vst [vmem:[%s3 + $0x30] sm:$0xff] %v668
  %1304 = vst [vmem:[%s3 + $0x38] sm:$0xff] %v670
  %1305 = vst.msk [vmem:[%s3 + $0x40] sm:$0xff] %vm1298, %v1148
  %1306 = vst [vmem:[%s3 + $0x48] sm:$0xff] %v674
  %1307 = vst [vmem:[%s3 + $0x50] sm:$0xff] %v676
  %1308 = vst.msk [vmem:[%s3 + $0x58] sm:$0xff] %vm1298, %v1153
  %1309 = vst [vmem:[%s3 + $0x60] sm:$0xff] %v680
  %1310 = vst [vmem:[%s3 + $0x68] sm:$0xff] %v682
  %1311 = vst.msk [vmem:[%s3 + $0x70] sm:$0xff] %vm1298, %v1158
  %1312 = vst [vmem:[%s3 + $0x78] sm:$0xff] %v686
  %1313 = vst [vmem:[%s3 + $0x80] sm:$0xff] %v688
  %1314 = vst.msk [vmem:[%s3 + $0x88] sm:$0xff] %vm1298, %v1163
  %1315 = vst [vmem:[%s3 + $0x90] sm:$0xff] %v692
  %1316 = vst [vmem:[%s3 + $0x98] sm:$0xff] %v694
  %1317 = vst.msk [vmem:[%s3 + $0xa0] sm:$0xff] %vm1298, %v1168
  %1318 = vst [vmem:[%s3 + $0xa8] sm:$0xff] %v698
  %1319 = vst [vmem:[%s3 + $0xb0] sm:$0xff] %v700
  %1320 = vst.msk [vmem:[%s3 + $0xb8] sm:$0xff] %vm1298, %v1173
  %1321 = vst [vmem:[%s3 + $0xc0] sm:$0xff] %v704
  %1322 = vst [vmem:[%s3 + $0xc8] sm:$0xff] %v706
  %1323 = vst.msk [vmem:[%s3 + $0xd0] sm:$0xff] %vm1298, %v1178
  %1324 = vst [vmem:[%s3 + $0xd8] sm:$0xff] %v710
  %1325 = vst [vmem:[%s3 + $0xe0] sm:$0xff] %v712
  %1326 = vst.msk [vmem:[%s3 + $0xe8] sm:$0xff] %vm1298, %v1183
  %1327 = vst [vmem:[%s3 + $0xf0] sm:$0xff] %v716
  %1328 = vst [vmem:[%s3 + $0xf8] sm:$0xff] %v718
  %1329 = vst.msk [vmem:[%s3 + $0x100] sm:$0xff] %vm1298, %v1188
  %1330 = vst [vmem:[%s3 + $0x108] sm:$0xff] %v722
  %1331 = vst [vmem:[%s3 + $0x110] sm:$0xff] %v724
  %1332 = vst.msk [vmem:[%s3 + $0x118] sm:$0xff] %vm1298, %v1193
  %1333 = vst [vmem:[%s3 + $0x120] sm:$0xff] %v728
  %1334 = vst [vmem:[%s3 + $0x128] sm:$0xff] %v730
  %1335 = vst.msk [vmem:[%s3 + $0x130] sm:$0xff] %vm1298, %v1198
  %1336 = vst [vmem:[%s3 + $0x138] sm:$0xff] %v734
  %1337 = vst [vmem:[%s3 + $0x140] sm:$0xff] %v736
  %1338 = vst.msk [vmem:[%s3 + $0x148] sm:$0xff] %vm1298, %v1203
  %1339 = vst [vmem:[%s3 + $0x150] sm:$0xff] %v740
  %1340 = vst [vmem:[%s3 + $0x158] sm:$0xff] %v742
  %1341 = vst.msk [vmem:[%s3 + $0x160] sm:$0xff] %vm1298, %v1208
  %1342 = vst [vmem:[%s3 + $0x168] sm:$0xff] %v746
  %1343 = vst [vmem:[%s3 + $0x170] sm:$0xff] %v748
  %1344 = vst.msk [vmem:[%s3 + $0x178] sm:$0xff] %vm1298, %v1213
  %1345 = vst [vmem:[%s3 + $0x180] sm:$0xff] %v752
  %1346 = vst [vmem:[%s3 + $0x188] sm:$0xff] %v754
  %1347 = vst.msk [vmem:[%s3 + $0x190] sm:$0xff] %vm1298, %v1218
  %1348 = vst [vmem:[%s3 + $0x198] sm:$0xff] %v758
  %1349 = vst [vmem:[%s3 + $0x1a0] sm:$0xff] %v760
  %1350 = vst.msk [vmem:[%s3 + $0x1a8] sm:$0xff] %vm1298, %v1223
  %1351 = vst [vmem:[%s3 + $0x1b0] sm:$0xff] %v764
  %1352 = vst [vmem:[%s3 + $0x1b8] sm:$0xff] %v766
  %1353 = vst.msk [vmem:[%s3 + $0x1c0] sm:$0xff] %vm1298, %v1228
  %1354 = vst [vmem:[%s3 + $0x1c8] sm:$0xff] %v770
  %1355 = vst [vmem:[%s3 + $0x1d0] sm:$0xff] %v772
  %1356 = vst.msk [vmem:[%s3 + $0x1d8] sm:$0xff] %vm1298, %v1233
  %1357 = vst [vmem:[%s3 + $0x1e0] sm:$0xff] %v776
  %1358 = vst [vmem:[%s3 + $0x1e8] sm:$0xff] %v778
  %1359 = vst.msk [vmem:[%s3 + $0x1f0] sm:$0xff] %vm1298, %v1238
  %1360 = vst [vmem:[%s3 + $0x1f8] sm:$0xff] %v782
  %1361 = vst [vmem:[%s3 + $0x200] sm:$0xff] %v784
  %1362 = vst.msk [vmem:[%s3 + $0x208] sm:$0xff] %vm1298, %v1243
  %1363 = vst [vmem:[%s3 + $0x210] sm:$0xff] %v788
  %1364 = vst [vmem:[%s3 + $0x218] sm:$0xff] %v790
  %1365 = vst.msk [vmem:[%s3 + $0x220] sm:$0xff] %vm1298, %v1248
  %1366 = vst [vmem:[%s3 + $0x228] sm:$0xff] %v794
  %1367 = vst [vmem:[%s3 + $0x230] sm:$0xff] %v796
  %1368 = vst.msk [vmem:[%s3 + $0x238] sm:$0xff] %vm1298, %v1253
  %1369 = vst [vmem:[%s3 + $0x240] sm:$0xff] %v800
  %1370 = vst [vmem:[%s3 + $0x248] sm:$0xff] %v802
  %1371 = vst.msk [vmem:[%s3 + $0x250] sm:$0xff] %vm1298, %v1258
  %1372 = vst [vmem:[%s3 + $0x258] sm:$0xff] %v806
  %1373 = vst [vmem:[%s3 + $0x260] sm:$0xff] %v808
  %1374 = vst.msk [vmem:[%s3 + $0x268] sm:$0xff] %vm1298, %v1263
  %1375 = vst [vmem:[%s3 + $0x270] sm:$0xff] %v812
  %1376 = vst [vmem:[%s3 + $0x278] sm:$0xff] %v814
  %1377 = vst.msk [vmem:[%s3 + $0x280] sm:$0xff] %vm1298, %v1268
  %1378 = vst [vmem:[%s3 + $0x288] sm:$0xff] %v818
  %1379 = vst [vmem:[%s3 + $0x290] sm:$0xff] %v820
  %1380 = vst.msk [vmem:[%s3 + $0x298] sm:$0xff] %vm1298, %v1273
  %1381 = vst [vmem:[%s3 + $0x2a0] sm:$0xff] %v824
  %1382 = vst [vmem:[%s3 + $0x2a8] sm:$0xff] %v826
  %1383 = vst.msk [vmem:[%s3 + $0x2b0] sm:$0xff] %vm1298, %v1278
  %1384 = vst [vmem:[%s3 + $0x2b8] sm:$0xff] %v830
  %1385 = vst [vmem:[%s3 + $0x2c0] sm:$0xff] %v832
  %1386 = vst.msk [vmem:[%s3 + $0x2c8] sm:$0xff] %vm1298, %v1283
  %1387 = vst [vmem:[%s3 + $0x2d0] sm:$0xff] %v836
  %1388 = vst [vmem:[%s3 + $0x2d8] sm:$0xff] %v838
  %1389 = vst.msk [vmem:[%s3 + $0x2e0] sm:$0xff] %vm1298, %v1288
  %1390 = vst [vmem:[%s3 + $0x2e8] sm:$0xff] %v842
  %1391 = vst [vmem:[%s3 + $0x2f0] sm:$0xff] %v844
  %1392 = vst.msk [vmem:[%s3 + $0x2f8] sm:$0xff] %vm1298, %v1293
  // Predicated region
  $region14: #{matmul_op.1} parent=0 // pred_check
    _
  $region15: #{matmul_op.1} parent=0 // pred_check_branch
    %1394 = sbr.rel (0) target = $region17
  $region16: #{matmul_op.1} parent=0 // pred_region
    _
  $region17: #{matmul_op.1} parent=0 // pred_fallthru
    _
  // Predicated region
  $region18: #{matmul_op.1} parent=0 // pred_check
    _
  $region19: #{matmul_op.1} parent=0 // pred_check_branch
    %1396 = sbr.rel (0) target = $region21
  $region20: #{matmul_op.1} parent=0 // pred_region
    _
  $region21: #{matmul_op.1} parent=0 // pred_fallthru
    _

</llo_original>
